<compile_context>
chip_gen: v7x
topology: tpu7x:2x2x1
jax: 0.10.0
libtpu: 0.0.40
codegen_flags: <defaults>
</compile_context>

<pallas_src>
import jax
import jax.numpy as jnp
from jax.experimental import pallas as pl
from jax.experimental.pallas import tpu as pltpu

EPS = 1e-5


# --------------------------------------------------------------------------
# Kernel
# --------------------------------------------------------------------------
def conv1d_cnn_kernel(xt_ref, w1_ref, t1_ref, w2_ref, t2_ref,
                      fw1_ref, fb1_ref, fw2_ref, fb2_ref, fw3_ref, fb3_ref,
                      out_ref):
    xt = xt_ref[...]                        # (L, TN) f32, batch on the lane axis
    L, TN = xt.shape
    L1 = L - 2                              # conv1 output length (12)
    L2 = L1 // 2 - 2                        # conv2 output length (4)

    w1 = w1_ref[...]                        # (32, 3)  BN scale folded in
    t1 = t1_ref[...]                        # (32, 1)  conv1 bias + BN shift

    # conv1 (1->32, k=3) as VPU outer products, fused with the BN affine,
    # maxpool(2) and ReLU:  max(relu(a + t), relu(b + t)) == relu(max(a, b) + t).
    def conv1_col(t):                       # -> (32, TN)
        acc = w1[:, 0:1] * xt[t:t + 1, :]
        acc = acc + w1[:, 1:2] * xt[t + 1:t + 2, :]
        acc = acc + w1[:, 2:3] * xt[t + 2:t + 3, :]
        return acc

    pooled = [
        jnp.maximum(jnp.maximum(conv1_col(2 * p), conv1_col(2 * p + 1)) + t1, 0.0)
        .astype(jnp.bfloat16)
        for p in range(L1 // 2)             # 6 x (32, TN)
    ]

    # conv2 (32->64, k=3): fused im2col, ONE MXU matmul with K=96 covering all
    # L2=4 output positions (bf16 operands, f32 accumulation).
    patch = jnp.concatenate(
        [jnp.concatenate([pooled[t + k] for k in range(3)], axis=0)   # (96, TN)
         for t in range(L2)], axis=1)                                 # (96, L2*TN)
    g = jnp.dot(w2_ref[...], patch, preferred_element_type=jnp.float32)
    g = jnp.maximum(g + t2_ref[...], 0.0)                             # (64, L2*TN)

    # maxpool(2) over time + flatten (row order j = t*64 + c; fc1 columns were
    # pre-permuted in the wrapper to match PyTorch's (N, C, T) flatten order).
    p0 = jnp.maximum(g[:, 0 * TN:1 * TN], g[:, 1 * TN:2 * TN])        # t = 0
    p1 = jnp.maximum(g[:, 2 * TN:3 * TN], g[:, 3 * TN:4 * TN])        # t = 1
    flat = jnp.concatenate([p0, p1], axis=0).astype(jnp.bfloat16)     # (128, TN)

    # dropout(0.5): identity in eval mode.
    # TODO(synk): training-mode stochastic dropout not implemented (inference).

    # fc1 / fc2 on the MXU (bf16 operands, f32 accumulation).
    z = jnp.dot(fw1_ref[...], flat, preferred_element_type=jnp.float32)
    z = jnp.maximum(z + fb1_ref[...], 0.0)                            # (64, TN)
    z = jnp.dot(fw2_ref[...], z.astype(jnp.bfloat16),
                preferred_element_type=jnp.float32)
    z = jnp.maximum(z + fb2_ref[...], 0.0)                            # (32, TN)

    # fc3 (32 -> 1) on the VPU/XLU (multiply + sublane reduce): frees the MXU
    # and produces a lane-dense (1, TN) row for an unmasked store.
    logits = jnp.sum(z * fw3_ref[...], axis=0, keepdims=True) + fb3_ref[...]
    out_ref[0] = jax.nn.sigmoid(logits)                               # (1, TN)


# --------------------------------------------------------------------------
# Wrapper
# --------------------------------------------------------------------------
def conv1d_cnn(x, params, *, tile_n=None):
    """x: (N, 1, L=14) float32 (PyTorch NCL). Returns (N, 1) float32."""
    N, _, L = x.shape
    assert L == 14, "fc1 expects 64*2 flattened features => input length 14"

    if tile_n is None:
        # Lane-dense batch tile (multiple of 128); VMEM use per tile is ~MBs,
        # well inside v7x's 64 MiB / the 32 MiB scoped default.
        tile_n = min(512, ((N + 127) // 128) * 128)
    num_tiles = (N + tile_n - 1) // tile_n
    n_pad = num_tiles * tile_n

    # Batch onto the lane axis; zero-pad the last partial tile.
    xt = jnp.transpose(x[:, 0, :])                       # (L, N)
    xt = jnp.pad(xt, ((0, 0), (0, n_pad - N)))           # (L, n_pad)

    def _const_spec(p):                                  # weights: VMEM-resident
        return pl.BlockSpec(p.shape, lambda i: (0, 0))

    grid_spec = pltpu.PrefetchScalarGridSpec(
        num_scalar_prefetch=0,
        grid=(num_tiles,),
        in_specs=[pl.BlockSpec((L, tile_n), lambda i: (0, i))]
                 + [_const_spec(p) for p in params],
        out_specs=pl.BlockSpec((1, 1, tile_n), lambda i: (i, 0, 0)),
    )
    out = pl.pallas_call(
        conv1d_cnn_kernel,
        out_shape=jax.ShapeDtypeStruct((num_tiles, 1, tile_n), jnp.float32),
        grid_spec=grid_spec,
        compiler_params=pltpu.CompilerParams(
            dimension_semantics=("parallel",)),
    )(xt, *params)
    return out.reshape(n_pad, 1)[:N]                     # (N, 1)


# --------------------------------------------------------------------------
# Parameters (PyTorch layout) + glue to kernel layout
# --------------------------------------------------------------------------
def init_torch_params(key):
    ks = jax.random.split(key, 8)
    return dict(
        c1w=jax.random.normal(ks[0], (32, 1, 3), jnp.float32) * 0.20,
        c1b=jax.random.normal(ks[1], (32,), jnp.float32) * 0.05,
        c2w=jax.random.normal(ks[2], (64, 32, 3), jnp.float32) * 0.10,
        c2b=jax.random.normal(ks[3], (64,), jnp.float32) * 0.05,
        f1w=jax.random.normal(ks[4], (64, 128), jnp.float32) * 0.08,
        f1b=jax.random.normal(ks[5], (64,), jnp.float32) * 0.05,
        f2w=jax.random.normal(ks[6], (32, 64), jnp.float32) * 0.10,
        f2b=jnp.zeros((32,), jnp.float32),
        f3w=jax.random.normal(ks[7], (1, 32), jnp.float32) * 0.15,
        f3b=jnp.zeros((1,), jnp.float32),
        # BatchNorm (gamma, beta, running_mean, running_var) at PyTorch init.
        bn1=(jnp.ones((32,), jnp.float32), jnp.zeros((32,), jnp.float32),
             jnp.zeros((32,), jnp.float32), jnp.ones((32,), jnp.float32)),
        bn2=(jnp.ones((64,), jnp.float32), jnp.zeros((64,), jnp.float32),
             jnp.zeros((64,), jnp.float32), jnp.ones((64,), jnp.float32)),
    )


def to_kernel_params(tp):
    """Fold conv bias + eval-mode BN into the weights; lay out for the kernel."""
    g1, be1, m1, v1 = tp['bn1']
    g2, be2, m2, v2 = tp['bn2']
    s1 = g1 / jnp.sqrt(v1 + EPS)
    s2 = g2 / jnp.sqrt(v2 + EPS)

    w1c = tp['c1w'][:, 0, :] * s1[:, None]                              # (32, 3)
    t1c = (be1 - m1 * s1 + s1 * tp['c1b'])[:, None]                     # (32, 1)
    # fused im2col weight: row index = k*32 + c_in, BN scale folded in.
    w2ft = jnp.transpose(tp['c2w'] * s2[:, None, None],
                         (0, 2, 1)).reshape(64, 96).astype(jnp.bfloat16)
    t2c = (be2 - m2 * s2 + s2 * tp['c2b'])[:, None]                     # (64, 1)

    # fc1: kernel flatten order j = t*64 + c; PyTorch flatten f = c*2 + t.
    j = jnp.arange(128)
    fw1t = tp['f1w'][:, (j % 64) * 2 + (j // 64)].astype(jnp.bfloat16)  # (64, 128)
    fb1c = tp['f1b'][:, None]                                           # (64, 1)
    fw2t = tp['f2w'].astype(jnp.bfloat16)                               # (32, 64)
    fb2c = tp['f2b'][:, None]                                           # (32, 1)
    fw3c = tp['f3w'].T                                                  # (32, 1) f32
    fb3 = tp['f3b'][:, None]                                            # (1, 1)
    return (w1c, t1c, w2ft, t2c, fw1t, fb1c, fw2t, fb2c, fw3c, fb3)


# --------------------------------------------------------------------------
# Pure-JAX f32 reference (PyTorch graph, eval mode) for verification
# --------------------------------------------------------------------------
def reference_forward(x, tp):
    def conv1d(v, w, b):                    # v (N,Cin,T), w (Cout,Cin,K)
        K = w.shape[-1]
        T = v.shape[-1] - K + 1
        out = sum(jnp.einsum('nct,oc->not', v[:, :, k:k + T], w[:, :, k])
                  for k in range(K))
        return out + b[None, :, None]

    def bn(v, p):                           # eval-mode batchnorm
        g, b, m, var = p
        s = g / jnp.sqrt(var + EPS)
        return v * s[None, :, None] + (b - m * s)[None, :, None]

    def pool(v):
        return jnp.maximum(v[:, :, 0::2], v[:, :, 1::2])

    h = pool(jax.nn.relu(bn(conv1d(x, tp['c1w'], tp['c1b']), tp['bn1'])))
    h = pool(jax.nn.relu(bn(conv1d(h, tp['c2w'], tp['c2b']), tp['bn2'])))
    flat = h.reshape(h.shape[0], -1)
    z = jax.nn.relu(flat @ tp['f1w'].T + tp['f1b'])
    z = jax.nn.relu(z @ tp['f2w'].T + tp['f2b'])
    return jax.nn.sigmoid(z @ tp['f3w'].T + tp['f3b'])


if __name__ == "__main__":
    key = jax.random.PRNGKey(0)
    kx, kp = jax.random.split(key)

    # L=14 => conv1->12 -> pool->6 -> conv2->4 -> pool->2 => 64*2 = 128 = fc1 in.
    N, L = 2, 14
    x = jax.random.normal(kx, (N, 1, L), jnp.float32)
    tp = init_torch_params(kp)
    params = to_kernel_params(tp)

    y = jax.block_until_ready(conv1d_cnn(x, params))
    assert y.shape == (N, 1) and y.dtype == jnp.float32
    assert bool(jnp.all((y >= 0.0) & (y <= 1.0)))

    y_ref = reference_forward(x, tp)
    assert bool(jnp.allclose(y, y_ref, atol=2e-2)), (y, y_ref)

    print("KERNEL_OK")
</pallas_src>

<mosaic_0001>
module attributes {stable_mosaic.version = 11 : i64} {
  func.func @conv1d_cnn_kernel(%arg0: i32, %arg1: memref<14x128xf32, #tpu.memory_space<vmem>>, %arg2: memref<32x3xf32, #tpu.memory_space<vmem>>, %arg3: memref<32x1xf32, #tpu.memory_space<vmem>>, %arg4: memref<64x96xbf16, #tpu.memory_space<vmem>>, %arg5: memref<64x1xf32, #tpu.memory_space<vmem>>, %arg6: memref<64x128xbf16, #tpu.memory_space<vmem>>, %arg7: memref<64x1xf32, #tpu.memory_space<vmem>>, %arg8: memref<32x64xbf16, #tpu.memory_space<vmem>>, %arg9: memref<32x1xf32, #tpu.memory_space<vmem>>, %arg10: memref<32x1xf32, #tpu.memory_space<vmem>>, %arg11: memref<1x1xf32, #tpu.memory_space<vmem>>, %arg12: memref<1x1x128xf32, #tpu.memory_space<vmem>>) attributes {dimension_semantics = [#tpu.dimension_semantics<parallel>], iteration_bounds = array<i64: 1>, scalar_prefetch = 0 : i64, scratch_operands = 0 : i64, tpu.core_type = #tpu.core_type<tc>, window_params = [{transform_indices = @transform_0, window_bounds = array<i64: 14, 128>}, {pipeline_mode = #tpu.pipeline_mode<synchronous>, transform_indices = @transform_1, window_bounds = array<i64: 32, 3>}, {pipeline_mode = #tpu.pipeline_mode<synchronous>, transform_indices = @transform_2, window_bounds = array<i64: 32, 1>}, {pipeline_mode = #tpu.pipeline_mode<synchronous>, transform_indices = @transform_3, window_bounds = array<i64: 64, 96>}, {pipeline_mode = #tpu.pipeline_mode<synchronous>, transform_indices = @transform_4, window_bounds = array<i64: 64, 1>}, {pipeline_mode = #tpu.pipeline_mode<synchronous>, transform_indices = @transform_5, window_bounds = array<i64: 64, 128>}, {pipeline_mode = #tpu.pipeline_mode<synchronous>, transform_indices = @transform_6, window_bounds = array<i64: 64, 1>}, {pipeline_mode = #tpu.pipeline_mode<synchronous>, transform_indices = @transform_7, window_bounds = array<i64: 32, 64>}, {pipeline_mode = #tpu.pipeline_mode<synchronous>, transform_indices = @transform_8, window_bounds = array<i64: 32, 1>}, {pipeline_mode = #tpu.pipeline_mode<synchronous>, transform_indices = @transform_9, window_bounds = array<i64: 32, 1>}, {pipeline_mode = #tpu.pipeline_mode<synchronous>, transform_indices = @transform_10, window_bounds = array<i64: 1, 1>}, {transform_indices = @transform_11, window_bounds = array<i64: 1, 1, 128>}]} {
    %c0 = arith.constant 0 : index
    %c0_0 = arith.constant 0 : index
    %0 = vector.load %arg1[%c0, %c0_0] : memref<14x128xf32, #tpu.memory_space<vmem>>, vector<14x128xf32>
    %c0_1 = arith.constant 0 : index
    %c0_2 = arith.constant 0 : index
    %1 = vector.load %arg2[%c0_1, %c0_2] : memref<32x3xf32, #tpu.memory_space<vmem>>, vector<32x3xf32>
    %c0_3 = arith.constant 0 : index
    %c0_4 = arith.constant 0 : index
    %2 = vector.load %arg3[%c0_3, %c0_4] : memref<32x1xf32, #tpu.memory_space<vmem>>, vector<32x1xf32>
    %3 = vector.extract_strided_slice %1 {offsets = [0, 0], sizes = [32, 1], strides = [1, 1]} : vector<32x3xf32> to vector<32x1xf32>
    %4 = vector.extract_strided_slice %0 {offsets = [0, 0], sizes = [1, 128], strides = [1, 1]} : vector<14x128xf32> to vector<1x128xf32>
    %5 = vector.broadcast %3 : vector<32x1xf32> to vector<32x128xf32>
    %6 = vector.broadcast %4 : vector<1x128xf32> to vector<32x128xf32>
    %7 = arith.mulf %5, %6 : vector<32x128xf32>
    %8 = vector.extract_strided_slice %1 {offsets = [0, 1], sizes = [32, 1], strides = [1, 1]} : vector<32x3xf32> to vector<32x1xf32>
    %9 = vector.extract_strided_slice %0 {offsets = [1, 0], sizes = [1, 128], strides = [1, 1]} : vector<14x128xf32> to vector<1x128xf32>
    %10 = vector.broadcast %8 : vector<32x1xf32> to vector<32x128xf32>
    %11 = vector.broadcast %9 : vector<1x128xf32> to vector<32x128xf32>
    %12 = arith.mulf %10, %11 : vector<32x128xf32>
    %13 = arith.addf %7, %12 : vector<32x128xf32>
    %14 = vector.extract_strided_slice %1 {offsets = [0, 2], sizes = [32, 1], strides = [1, 1]} : vector<32x3xf32> to vector<32x1xf32>
    %15 = vector.extract_strided_slice %0 {offsets = [2, 0], sizes = [1, 128], strides = [1, 1]} : vector<14x128xf32> to vector<1x128xf32>
    %16 = vector.broadcast %14 : vector<32x1xf32> to vector<32x128xf32>
    %17 = vector.broadcast %15 : vector<1x128xf32> to vector<32x128xf32>
    %18 = arith.mulf %16, %17 : vector<32x128xf32>
    %19 = arith.addf %13, %18 : vector<32x128xf32>
    %20 = vector.extract_strided_slice %1 {offsets = [0, 0], sizes = [32, 1], strides = [1, 1]} : vector<32x3xf32> to vector<32x1xf32>
    %21 = vector.extract_strided_slice %0 {offsets = [1, 0], sizes = [1, 128], strides = [1, 1]} : vector<14x128xf32> to vector<1x128xf32>
    %22 = vector.broadcast %20 : vector<32x1xf32> to vector<32x128xf32>
    %23 = vector.broadcast %21 : vector<1x128xf32> to vector<32x128xf32>
    %24 = arith.mulf %22, %23 : vector<32x128xf32>
    %25 = vector.extract_strided_slice %1 {offsets = [0, 1], sizes = [32, 1], strides = [1, 1]} : vector<32x3xf32> to vector<32x1xf32>
    %26 = vector.extract_strided_slice %0 {offsets = [2, 0], sizes = [1, 128], strides = [1, 1]} : vector<14x128xf32> to vector<1x128xf32>
    %27 = vector.broadcast %25 : vector<32x1xf32> to vector<32x128xf32>
    %28 = vector.broadcast %26 : vector<1x128xf32> to vector<32x128xf32>
    %29 = arith.mulf %27, %28 : vector<32x128xf32>
    %30 = arith.addf %24, %29 : vector<32x128xf32>
    %31 = vector.extract_strided_slice %1 {offsets = [0, 2], sizes = [32, 1], strides = [1, 1]} : vector<32x3xf32> to vector<32x1xf32>
    %32 = vector.extract_strided_slice %0 {offsets = [3, 0], sizes = [1, 128], strides = [1, 1]} : vector<14x128xf32> to vector<1x128xf32>
    %33 = vector.broadcast %31 : vector<32x1xf32> to vector<32x128xf32>
    %34 = vector.broadcast %32 : vector<1x128xf32> to vector<32x128xf32>
    %35 = arith.mulf %33, %34 : vector<32x128xf32>
    %36 = arith.addf %30, %35 : vector<32x128xf32>
    %37 = arith.maximumf %19, %36 : vector<32x128xf32>
    %38 = vector.broadcast %2 : vector<32x1xf32> to vector<32x128xf32>
    %39 = arith.addf %37, %38 : vector<32x128xf32>
    %cst = arith.constant 0.000000e+00 : f32
    %40 = vector.broadcast %cst : f32 to vector<32x128xf32>
    %41 = arith.maximumf %39, %40 : vector<32x128xf32>
    %42 = arith.truncf %41 : vector<32x128xf32> to vector<32x128xbf16>
    %43 = vector.extract_strided_slice %1 {offsets = [0, 0], sizes = [32, 1], strides = [1, 1]} : vector<32x3xf32> to vector<32x1xf32>
    %44 = vector.extract_strided_slice %0 {offsets = [2, 0], sizes = [1, 128], strides = [1, 1]} : vector<14x128xf32> to vector<1x128xf32>
    %45 = vector.broadcast %43 : vector<32x1xf32> to vector<32x128xf32>
    %46 = vector.broadcast %44 : vector<1x128xf32> to vector<32x128xf32>
    %47 = arith.mulf %45, %46 : vector<32x128xf32>
    %48 = vector.extract_strided_slice %1 {offsets = [0, 1], sizes = [32, 1], strides = [1, 1]} : vector<32x3xf32> to vector<32x1xf32>
    %49 = vector.extract_strided_slice %0 {offsets = [3, 0], sizes = [1, 128], strides = [1, 1]} : vector<14x128xf32> to vector<1x128xf32>
    %50 = vector.broadcast %48 : vector<32x1xf32> to vector<32x128xf32>
    %51 = vector.broadcast %49 : vector<1x128xf32> to vector<32x128xf32>
    %52 = arith.mulf %50, %51 : vector<32x128xf32>
    %53 = arith.addf %47, %52 : vector<32x128xf32>
    %54 = vector.extract_strided_slice %1 {offsets = [0, 2], sizes = [32, 1], strides = [1, 1]} : vector<32x3xf32> to vector<32x1xf32>
    %55 = vector.extract_strided_slice %0 {offsets = [4, 0], sizes = [1, 128], strides = [1, 1]} : vector<14x128xf32> to vector<1x128xf32>
    %56 = vector.broadcast %54 : vector<32x1xf32> to vector<32x128xf32>
    %57 = vector.broadcast %55 : vector<1x128xf32> to vector<32x128xf32>
    %58 = arith.mulf %56, %57 : vector<32x128xf32>
    %59 = arith.addf %53, %58 : vector<32x128xf32>
    %60 = vector.extract_strided_slice %1 {offsets = [0, 0], sizes = [32, 1], strides = [1, 1]} : vector<32x3xf32> to vector<32x1xf32>
    %61 = vector.extract_strided_slice %0 {offsets = [3, 0], sizes = [1, 128], strides = [1, 1]} : vector<14x128xf32> to vector<1x128xf32>
    %62 = vector.broadcast %60 : vector<32x1xf32> to vector<32x128xf32>
    %63 = vector.broadcast %61 : vector<1x128xf32> to vector<32x128xf32>
    %64 = arith.mulf %62, %63 : vector<32x128xf32>
    %65 = vector.extract_strided_slice %1 {offsets = [0, 1], sizes = [32, 1], strides = [1, 1]} : vector<32x3xf32> to vector<32x1xf32>
    %66 = vector.extract_strided_slice %0 {offsets = [4, 0], sizes = [1, 128], strides = [1, 1]} : vector<14x128xf32> to vector<1x128xf32>
    %67 = vector.broadcast %65 : vector<32x1xf32> to vector<32x128xf32>
    %68 = vector.broadcast %66 : vector<1x128xf32> to vector<32x128xf32>
    %69 = arith.mulf %67, %68 : vector<32x128xf32>
    %70 = arith.addf %64, %69 : vector<32x128xf32>
    %71 = vector.extract_strided_slice %1 {offsets = [0, 2], sizes = [32, 1], strides = [1, 1]} : vector<32x3xf32> to vector<32x1xf32>
    %72 = vector.extract_strided_slice %0 {offsets = [5, 0], sizes = [1, 128], strides = [1, 1]} : vector<14x128xf32> to vector<1x128xf32>
    %73 = vector.broadcast %71 : vector<32x1xf32> to vector<32x128xf32>
    %74 = vector.broadcast %72 : vector<1x128xf32> to vector<32x128xf32>
    %75 = arith.mulf %73, %74 : vector<32x128xf32>
    %76 = arith.addf %70, %75 : vector<32x128xf32>
    %77 = arith.maximumf %59, %76 : vector<32x128xf32>
    %78 = vector.broadcast %2 : vector<32x1xf32> to vector<32x128xf32>
    %79 = arith.addf %77, %78 : vector<32x128xf32>
    %cst_5 = arith.constant 0.000000e+00 : f32
    %80 = vector.broadcast %cst_5 : f32 to vector<32x128xf32>
    %81 = arith.maximumf %79, %80 : vector<32x128xf32>
    %82 = arith.truncf %81 : vector<32x128xf32> to vector<32x128xbf16>
    %83 = vector.extract_strided_slice %1 {offsets = [0, 0], sizes = [32, 1], strides = [1, 1]} : vector<32x3xf32> to vector<32x1xf32>
    %84 = vector.extract_strided_slice %0 {offsets = [4, 0], sizes = [1, 128], strides = [1, 1]} : vector<14x128xf32> to vector<1x128xf32>
    %85 = vector.broadcast %83 : vector<32x1xf32> to vector<32x128xf32>
    %86 = vector.broadcast %84 : vector<1x128xf32> to vector<32x128xf32>
    %87 = arith.mulf %85, %86 : vector<32x128xf32>
    %88 = vector.extract_strided_slice %1 {offsets = [0, 1], sizes = [32, 1], strides = [1, 1]} : vector<32x3xf32> to vector<32x1xf32>
    %89 = vector.extract_strided_slice %0 {offsets = [5, 0], sizes = [1, 128], strides = [1, 1]} : vector<14x128xf32> to vector<1x128xf32>
    %90 = vector.broadcast %88 : vector<32x1xf32> to vector<32x128xf32>
    %91 = vector.broadcast %89 : vector<1x128xf32> to vector<32x128xf32>
    %92 = arith.mulf %90, %91 : vector<32x128xf32>
    %93 = arith.addf %87, %92 : vector<32x128xf32>
    %94 = vector.extract_strided_slice %1 {offsets = [0, 2], sizes = [32, 1], strides = [1, 1]} : vector<32x3xf32> to vector<32x1xf32>
    %95 = vector.extract_strided_slice %0 {offsets = [6, 0], sizes = [1, 128], strides = [1, 1]} : vector<14x128xf32> to vector<1x128xf32>
    %96 = vector.broadcast %94 : vector<32x1xf32> to vector<32x128xf32>
    %97 = vector.broadcast %95 : vector<1x128xf32> to vector<32x128xf32>
    %98 = arith.mulf %96, %97 : vector<32x128xf32>
    %99 = arith.addf %93, %98 : vector<32x128xf32>
    %100 = vector.extract_strided_slice %1 {offsets = [0, 0], sizes = [32, 1], strides = [1, 1]} : vector<32x3xf32> to vector<32x1xf32>
    %101 = vector.extract_strided_slice %0 {offsets = [5, 0], sizes = [1, 128], strides = [1, 1]} : vector<14x128xf32> to vector<1x128xf32>
    %102 = vector.broadcast %100 : vector<32x1xf32> to vector<32x128xf32>
    %103 = vector.broadcast %101 : vector<1x128xf32> to vector<32x128xf32>
    %104 = arith.mulf %102, %103 : vector<32x128xf32>
    %105 = vector.extract_strided_slice %1 {offsets = [0, 1], sizes = [32, 1], strides = [1, 1]} : vector<32x3xf32> to vector<32x1xf32>
    %106 = vector.extract_strided_slice %0 {offsets = [6, 0], sizes = [1, 128], strides = [1, 1]} : vector<14x128xf32> to vector<1x128xf32>
    %107 = vector.broadcast %105 : vector<32x1xf32> to vector<32x128xf32>
    %108 = vector.broadcast %106 : vector<1x128xf32> to vector<32x128xf32>
    %109 = arith.mulf %107, %108 : vector<32x128xf32>
    %110 = arith.addf %104, %109 : vector<32x128xf32>
    %111 = vector.extract_strided_slice %1 {offsets = [0, 2], sizes = [32, 1], strides = [1, 1]} : vector<32x3xf32> to vector<32x1xf32>
    %112 = vector.extract_strided_slice %0 {offsets = [7, 0], sizes = [1, 128], strides = [1, 1]} : vector<14x128xf32> to vector<1x128xf32>
    %113 = vector.broadcast %111 : vector<32x1xf32> to vector<32x128xf32>
    %114 = vector.broadcast %112 : vector<1x128xf32> to vector<32x128xf32>
    %115 = arith.mulf %113, %114 : vector<32x128xf32>
    %116 = arith.addf %110, %115 : vector<32x128xf32>
    %117 = arith.maximumf %99, %116 : vector<32x128xf32>
    %118 = vector.broadcast %2 : vector<32x1xf32> to vector<32x128xf32>
    %119 = arith.addf %117, %118 : vector<32x128xf32>
    %cst_6 = arith.constant 0.000000e+00 : f32
    %120 = vector.broadcast %cst_6 : f32 to vector<32x128xf32>
    %121 = arith.maximumf %119, %120 : vector<32x128xf32>
    %122 = arith.truncf %121 : vector<32x128xf32> to vector<32x128xbf16>
    %123 = vector.extract_strided_slice %1 {offsets = [0, 0], sizes = [32, 1], strides = [1, 1]} : vector<32x3xf32> to vector<32x1xf32>
    %124 = vector.extract_strided_slice %0 {offsets = [6, 0], sizes = [1, 128], strides = [1, 1]} : vector<14x128xf32> to vector<1x128xf32>
    %125 = vector.broadcast %123 : vector<32x1xf32> to vector<32x128xf32>
    %126 = vector.broadcast %124 : vector<1x128xf32> to vector<32x128xf32>
    %127 = arith.mulf %125, %126 : vector<32x128xf32>
    %128 = vector.extract_strided_slice %1 {offsets = [0, 1], sizes = [32, 1], strides = [1, 1]} : vector<32x3xf32> to vector<32x1xf32>
    %129 = vector.extract_strided_slice %0 {offsets = [7, 0], sizes = [1, 128], strides = [1, 1]} : vector<14x128xf32> to vector<1x128xf32>
    %130 = vector.broadcast %128 : vector<32x1xf32> to vector<32x128xf32>
    %131 = vector.broadcast %129 : vector<1x128xf32> to vector<32x128xf32>
    %132 = arith.mulf %130, %131 : vector<32x128xf32>
    %133 = arith.addf %127, %132 : vector<32x128xf32>
    %134 = vector.extract_strided_slice %1 {offsets = [0, 2], sizes = [32, 1], strides = [1, 1]} : vector<32x3xf32> to vector<32x1xf32>
    %135 = vector.extract_strided_slice %0 {offsets = [8, 0], sizes = [1, 128], strides = [1, 1]} : vector<14x128xf32> to vector<1x128xf32>
    %136 = vector.broadcast %134 : vector<32x1xf32> to vector<32x128xf32>
    %137 = vector.broadcast %135 : vector<1x128xf32> to vector<32x128xf32>
    %138 = arith.mulf %136, %137 : vector<32x128xf32>
    %139 = arith.addf %133, %138 : vector<32x128xf32>
    %140 = vector.extract_strided_slice %1 {offsets = [0, 0], sizes = [32, 1], strides = [1, 1]} : vector<32x3xf32> to vector<32x1xf32>
    %141 = vector.extract_strided_slice %0 {offsets = [7, 0], sizes = [1, 128], strides = [1, 1]} : vector<14x128xf32> to vector<1x128xf32>
    %142 = vector.broadcast %140 : vector<32x1xf32> to vector<32x128xf32>
    %143 = vector.broadcast %141 : vector<1x128xf32> to vector<32x128xf32>
    %144 = arith.mulf %142, %143 : vector<32x128xf32>
    %145 = vector.extract_strided_slice %1 {offsets = [0, 1], sizes = [32, 1], strides = [1, 1]} : vector<32x3xf32> to vector<32x1xf32>
    %146 = vector.extract_strided_slice %0 {offsets = [8, 0], sizes = [1, 128], strides = [1, 1]} : vector<14x128xf32> to vector<1x128xf32>
    %147 = vector.broadcast %145 : vector<32x1xf32> to vector<32x128xf32>
    %148 = vector.broadcast %146 : vector<1x128xf32> to vector<32x128xf32>
    %149 = arith.mulf %147, %148 : vector<32x128xf32>
    %150 = arith.addf %144, %149 : vector<32x128xf32>
    %151 = vector.extract_strided_slice %1 {offsets = [0, 2], sizes = [32, 1], strides = [1, 1]} : vector<32x3xf32> to vector<32x1xf32>
    %152 = vector.extract_strided_slice %0 {offsets = [9, 0], sizes = [1, 128], strides = [1, 1]} : vector<14x128xf32> to vector<1x128xf32>
    %153 = vector.broadcast %151 : vector<32x1xf32> to vector<32x128xf32>
    %154 = vector.broadcast %152 : vector<1x128xf32> to vector<32x128xf32>
    %155 = arith.mulf %153, %154 : vector<32x128xf32>
    %156 = arith.addf %150, %155 : vector<32x128xf32>
    %157 = arith.maximumf %139, %156 : vector<32x128xf32>
    %158 = vector.broadcast %2 : vector<32x1xf32> to vector<32x128xf32>
    %159 = arith.addf %157, %158 : vector<32x128xf32>
    %cst_7 = arith.constant 0.000000e+00 : f32
    %160 = vector.broadcast %cst_7 : f32 to vector<32x128xf32>
    %161 = arith.maximumf %159, %160 : vector<32x128xf32>
    %162 = arith.truncf %161 : vector<32x128xf32> to vector<32x128xbf16>
    %163 = vector.extract_strided_slice %1 {offsets = [0, 0], sizes = [32, 1], strides = [1, 1]} : vector<32x3xf32> to vector<32x1xf32>
    %164 = vector.extract_strided_slice %0 {offsets = [8, 0], sizes = [1, 128], strides = [1, 1]} : vector<14x128xf32> to vector<1x128xf32>
    %165 = vector.broadcast %163 : vector<32x1xf32> to vector<32x128xf32>
    %166 = vector.broadcast %164 : vector<1x128xf32> to vector<32x128xf32>
    %167 = arith.mulf %165, %166 : vector<32x128xf32>
    %168 = vector.extract_strided_slice %1 {offsets = [0, 1], sizes = [32, 1], strides = [1, 1]} : vector<32x3xf32> to vector<32x1xf32>
    %169 = vector.extract_strided_slice %0 {offsets = [9, 0], sizes = [1, 128], strides = [1, 1]} : vector<14x128xf32> to vector<1x128xf32>
    %170 = vector.broadcast %168 : vector<32x1xf32> to vector<32x128xf32>
    %171 = vector.broadcast %169 : vector<1x128xf32> to vector<32x128xf32>
    %172 = arith.mulf %170, %171 : vector<32x128xf32>
    %173 = arith.addf %167, %172 : vector<32x128xf32>
    %174 = vector.extract_strided_slice %1 {offsets = [0, 2], sizes = [32, 1], strides = [1, 1]} : vector<32x3xf32> to vector<32x1xf32>
    %175 = vector.extract_strided_slice %0 {offsets = [10, 0], sizes = [1, 128], strides = [1, 1]} : vector<14x128xf32> to vector<1x128xf32>
    %176 = vector.broadcast %174 : vector<32x1xf32> to vector<32x128xf32>
    %177 = vector.broadcast %175 : vector<1x128xf32> to vector<32x128xf32>
    %178 = arith.mulf %176, %177 : vector<32x128xf32>
    %179 = arith.addf %173, %178 : vector<32x128xf32>
    %180 = vector.extract_strided_slice %1 {offsets = [0, 0], sizes = [32, 1], strides = [1, 1]} : vector<32x3xf32> to vector<32x1xf32>
    %181 = vector.extract_strided_slice %0 {offsets = [9, 0], sizes = [1, 128], strides = [1, 1]} : vector<14x128xf32> to vector<1x128xf32>
    %182 = vector.broadcast %180 : vector<32x1xf32> to vector<32x128xf32>
    %183 = vector.broadcast %181 : vector<1x128xf32> to vector<32x128xf32>
    %184 = arith.mulf %182, %183 : vector<32x128xf32>
    %185 = vector.extract_strided_slice %1 {offsets = [0, 1], sizes = [32, 1], strides = [1, 1]} : vector<32x3xf32> to vector<32x1xf32>
    %186 = vector.extract_strided_slice %0 {offsets = [10, 0], sizes = [1, 128], strides = [1, 1]} : vector<14x128xf32> to vector<1x128xf32>
    %187 = vector.broadcast %185 : vector<32x1xf32> to vector<32x128xf32>
    %188 = vector.broadcast %186 : vector<1x128xf32> to vector<32x128xf32>
    %189 = arith.mulf %187, %188 : vector<32x128xf32>
    %190 = arith.addf %184, %189 : vector<32x128xf32>
    %191 = vector.extract_strided_slice %1 {offsets = [0, 2], sizes = [32, 1], strides = [1, 1]} : vector<32x3xf32> to vector<32x1xf32>
    %192 = vector.extract_strided_slice %0 {offsets = [11, 0], sizes = [1, 128], strides = [1, 1]} : vector<14x128xf32> to vector<1x128xf32>
    %193 = vector.broadcast %191 : vector<32x1xf32> to vector<32x128xf32>
    %194 = vector.broadcast %192 : vector<1x128xf32> to vector<32x128xf32>
    %195 = arith.mulf %193, %194 : vector<32x128xf32>
    %196 = arith.addf %190, %195 : vector<32x128xf32>
    %197 = arith.maximumf %179, %196 : vector<32x128xf32>
    %198 = vector.broadcast %2 : vector<32x1xf32> to vector<32x128xf32>
    %199 = arith.addf %197, %198 : vector<32x128xf32>
    %cst_8 = arith.constant 0.000000e+00 : f32
    %200 = vector.broadcast %cst_8 : f32 to vector<32x128xf32>
    %201 = arith.maximumf %199, %200 : vector<32x128xf32>
    %202 = arith.truncf %201 : vector<32x128xf32> to vector<32x128xbf16>
    %203 = vector.extract_strided_slice %1 {offsets = [0, 0], sizes = [32, 1], strides = [1, 1]} : vector<32x3xf32> to vector<32x1xf32>
    %204 = vector.extract_strided_slice %0 {offsets = [10, 0], sizes = [1, 128], strides = [1, 1]} : vector<14x128xf32> to vector<1x128xf32>
    %205 = vector.broadcast %203 : vector<32x1xf32> to vector<32x128xf32>
    %206 = vector.broadcast %204 : vector<1x128xf32> to vector<32x128xf32>
    %207 = arith.mulf %205, %206 : vector<32x128xf32>
    %208 = vector.extract_strided_slice %1 {offsets = [0, 1], sizes = [32, 1], strides = [1, 1]} : vector<32x3xf32> to vector<32x1xf32>
    %209 = vector.extract_strided_slice %0 {offsets = [11, 0], sizes = [1, 128], strides = [1, 1]} : vector<14x128xf32> to vector<1x128xf32>
    %210 = vector.broadcast %208 : vector<32x1xf32> to vector<32x128xf32>
    %211 = vector.broadcast %209 : vector<1x128xf32> to vector<32x128xf32>
    %212 = arith.mulf %210, %211 : vector<32x128xf32>
    %213 = arith.addf %207, %212 : vector<32x128xf32>
    %214 = vector.extract_strided_slice %1 {offsets = [0, 2], sizes = [32, 1], strides = [1, 1]} : vector<32x3xf32> to vector<32x1xf32>
    %215 = vector.extract_strided_slice %0 {offsets = [12, 0], sizes = [1, 128], strides = [1, 1]} : vector<14x128xf32> to vector<1x128xf32>
    %216 = vector.broadcast %214 : vector<32x1xf32> to vector<32x128xf32>
    %217 = vector.broadcast %215 : vector<1x128xf32> to vector<32x128xf32>
    %218 = arith.mulf %216, %217 : vector<32x128xf32>
    %219 = arith.addf %213, %218 : vector<32x128xf32>
    %220 = vector.extract_strided_slice %1 {offsets = [0, 0], sizes = [32, 1], strides = [1, 1]} : vector<32x3xf32> to vector<32x1xf32>
    %221 = vector.extract_strided_slice %0 {offsets = [11, 0], sizes = [1, 128], strides = [1, 1]} : vector<14x128xf32> to vector<1x128xf32>
    %222 = vector.broadcast %220 : vector<32x1xf32> to vector<32x128xf32>
    %223 = vector.broadcast %221 : vector<1x128xf32> to vector<32x128xf32>
    %224 = arith.mulf %222, %223 : vector<32x128xf32>
    %225 = vector.extract_strided_slice %1 {offsets = [0, 1], sizes = [32, 1], strides = [1, 1]} : vector<32x3xf32> to vector<32x1xf32>
    %226 = vector.extract_strided_slice %0 {offsets = [12, 0], sizes = [1, 128], strides = [1, 1]} : vector<14x128xf32> to vector<1x128xf32>
    %227 = vector.broadcast %225 : vector<32x1xf32> to vector<32x128xf32>
    %228 = vector.broadcast %226 : vector<1x128xf32> to vector<32x128xf32>
    %229 = arith.mulf %227, %228 : vector<32x128xf32>
    %230 = arith.addf %224, %229 : vector<32x128xf32>
    %231 = vector.extract_strided_slice %1 {offsets = [0, 2], sizes = [32, 1], strides = [1, 1]} : vector<32x3xf32> to vector<32x1xf32>
    %232 = vector.extract_strided_slice %0 {offsets = [13, 0], sizes = [1, 128], strides = [1, 1]} : vector<14x128xf32> to vector<1x128xf32>
    %233 = vector.broadcast %231 : vector<32x1xf32> to vector<32x128xf32>
    %234 = vector.broadcast %232 : vector<1x128xf32> to vector<32x128xf32>
    %235 = arith.mulf %233, %234 : vector<32x128xf32>
    %236 = arith.addf %230, %235 : vector<32x128xf32>
    %237 = arith.maximumf %219, %236 : vector<32x128xf32>
    %238 = vector.broadcast %2 : vector<32x1xf32> to vector<32x128xf32>
    %239 = arith.addf %237, %238 : vector<32x128xf32>
    %cst_9 = arith.constant 0.000000e+00 : f32
    %240 = vector.broadcast %cst_9 : f32 to vector<32x128xf32>
    %241 = arith.maximumf %239, %240 : vector<32x128xf32>
    %242 = arith.truncf %241 : vector<32x128xf32> to vector<32x128xbf16>
    %243 = tpu.concatenate %42, %82, %122 in 0 : vector<32x128xbf16>, vector<32x128xbf16>, vector<32x128xbf16> -> vector<96x128xbf16>
    %244 = tpu.concatenate %82, %122, %162 in 0 : vector<32x128xbf16>, vector<32x128xbf16>, vector<32x128xbf16> -> vector<96x128xbf16>
    %245 = tpu.concatenate %122, %162, %202 in 0 : vector<32x128xbf16>, vector<32x128xbf16>, vector<32x128xbf16> -> vector<96x128xbf16>
    %246 = tpu.concatenate %162, %202, %242 in 0 : vector<32x128xbf16>, vector<32x128xbf16>, vector<32x128xbf16> -> vector<96x128xbf16>
    %247 = tpu.concatenate %243, %244, %245, %246 in 1 : vector<96x128xbf16>, vector<96x128xbf16>, vector<96x128xbf16>, vector<96x128xbf16> -> vector<96x512xbf16>
    %c0_10 = arith.constant 0 : index
    %c0_11 = arith.constant 0 : index
    %248 = vector.load %arg4[%c0_10, %c0_11] : memref<64x96xbf16, #tpu.memory_space<vmem>>, vector<64x96xbf16>
    %cst_12 = arith.constant dense<0.000000e+00> : vector<64x512xf32>
    %249 = tpu.matmul %248, %247, %cst_12 {dimension_numbers = #tpu.dot_dimension_numbers<[1], [0], [0], [1], [0, 0, 1, 1], [], []>} : vector<64x96xbf16>, vector<96x512xbf16>, vector<64x512xf32> -> vector<64x512xf32>
    %c0_13 = arith.constant 0 : index
    %c0_14 = arith.constant 0 : index
    %250 = vector.load %arg5[%c0_13, %c0_14] : memref<64x1xf32, #tpu.memory_space<vmem>>, vector<64x1xf32>
    %251 = vector.broadcast %250 : vector<64x1xf32> to vector<64x512xf32>
    %252 = arith.addf %249, %251 : vector<64x512xf32>
    %cst_15 = arith.constant 0.000000e+00 : f32
    %253 = vector.broadcast %cst_15 : f32 to vector<64x512xf32>
    %254 = arith.maximumf %252, %253 : vector<64x512xf32>
    %255 = vector.extract_strided_slice %254 {offsets = [0, 0], sizes = [64, 128], strides = [1, 1]} : vector<64x512xf32> to vector<64x128xf32>
    %256 = vector.extract_strided_slice %254 {offsets = [0, 128], sizes = [64, 128], strides = [1, 1]} : vector<64x512xf32> to vector<64x128xf32>
    %257 = arith.maximumf %255, %256 : vector<64x128xf32>
    %258 = vector.extract_strided_slice %254 {offsets = [0, 256], sizes = [64, 128], strides = [1, 1]} : vector<64x512xf32> to vector<64x128xf32>
    %259 = vector.extract_strided_slice %254 {offsets = [0, 384], sizes = [64, 128], strides = [1, 1]} : vector<64x512xf32> to vector<64x128xf32>
    %260 = arith.maximumf %258, %259 : vector<64x128xf32>
    %261 = tpu.concatenate %257, %260 in 0 : vector<64x128xf32>, vector<64x128xf32> -> vector<128x128xf32>
    %262 = arith.truncf %261 : vector<128x128xf32> to vector<128x128xbf16>
    %c0_16 = arith.constant 0 : index
    %c0_17 = arith.constant 0 : index
    %263 = vector.load %arg6[%c0_16, %c0_17] : memref<64x128xbf16, #tpu.memory_space<vmem>>, vector<64x128xbf16>
    %cst_18 = arith.constant dense<0.000000e+00> : vector<64x128xf32>
    %264 = tpu.matmul %263, %262, %cst_18 {dimension_numbers = #tpu.dot_dimension_numbers<[1], [0], [0], [1], [0, 0, 1, 1], [], []>} : vector<64x128xbf16>, vector<128x128xbf16>, vector<64x128xf32> -> vector<64x128xf32>
    %c0_19 = arith.constant 0 : index
    %c0_20 = arith.constant 0 : index
    %265 = vector.load %arg7[%c0_19, %c0_20] : memref<64x1xf32, #tpu.memory_space<vmem>>, vector<64x1xf32>
    %266 = vector.broadcast %265 : vector<64x1xf32> to vector<64x128xf32>
    %267 = arith.addf %264, %266 : vector<64x128xf32>
    %cst_21 = arith.constant 0.000000e+00 : f32
    %268 = vector.broadcast %cst_21 : f32 to vector<64x128xf32>
    %269 = arith.maximumf %267, %268 : vector<64x128xf32>
    %c0_22 = arith.constant 0 : index
    %c0_23 = arith.constant 0 : index
    %270 = vector.load %arg8[%c0_22, %c0_23] : memref<32x64xbf16, #tpu.memory_space<vmem>>, vector<32x64xbf16>
    %271 = arith.truncf %269 : vector<64x128xf32> to vector<64x128xbf16>
    %cst_24 = arith.constant dense<0.000000e+00> : vector<32x128xf32>
    %272 = tpu.matmul %270, %271, %cst_24 {dimension_numbers = #tpu.dot_dimension_numbers<[1], [0], [0], [1], [0, 0, 1, 1], [], []>} : vector<32x64xbf16>, vector<64x128xbf16>, vector<32x128xf32> -> vector<32x128xf32>
    %c0_25 = arith.constant 0 : index
    %c0_26 = arith.constant 0 : index
    %273 = vector.load %arg9[%c0_25, %c0_26] : memref<32x1xf32, #tpu.memory_space<vmem>>, vector<32x1xf32>
    %274 = vector.broadcast %273 : vector<32x1xf32> to vector<32x128xf32>
    %275 = arith.addf %272, %274 : vector<32x128xf32>
    %cst_27 = arith.constant 0.000000e+00 : f32
    %276 = vector.broadcast %cst_27 : f32 to vector<32x128xf32>
    %277 = arith.maximumf %275, %276 : vector<32x128xf32>
    %c0_28 = arith.constant 0 : index
    %c0_29 = arith.constant 0 : index
    %278 = vector.load %arg10[%c0_28, %c0_29] : memref<32x1xf32, #tpu.memory_space<vmem>>, vector<32x1xf32>
    %279 = vector.broadcast %278 : vector<32x1xf32> to vector<32x128xf32>
    %280 = arith.mulf %277, %279 : vector<32x128xf32>
    %cst_30 = arith.constant dense<0.000000e+00> : vector<128xf32>
    %281 = vector.multi_reduction <add>, %280, %cst_30 [0] : vector<32x128xf32> to vector<128xf32>
    %282 = vector.shape_cast %281 : vector<128xf32> to vector<1x128xf32>
    %c0_31 = arith.constant 0 : index
    %c0_32 = arith.constant 0 : index
    %283 = vector.load %arg11[%c0_31, %c0_32] : memref<1x1xf32, #tpu.memory_space<vmem>>, vector<1x1xf32>
    %284 = vector.broadcast %283 : vector<1x1xf32> to vector<1x128xf32>
    %285 = arith.addf %282, %284 : vector<1x128xf32>
    %286 = arith.negf %285 : vector<1x128xf32>
    %287 = math.exp %286 : vector<1x128xf32>
    %cst_33 = arith.constant 1.000000e+00 : f32
    %288 = vector.broadcast %cst_33 : f32 to vector<1x128xf32>
    %289 = arith.addf %288, %287 : vector<1x128xf32>
    %290 = arith.divf %288, %289 : vector<1x128xf32>
    %c0_34 = arith.constant 0 : index
    %c0_35 = arith.constant 0 : index
    %c0_36 = arith.constant 0 : index
    %291 = vector.load %arg12[%c0_34, %c0_35, %c0_36] : memref<1x1x128xf32, #tpu.memory_space<vmem>>, vector<1x1x128xf32>
    %292 = vector.shape_cast %291 : vector<1x1x128xf32> to vector<1x128xf32>
    %293 = vector.shape_cast %290 : vector<1x128xf32> to vector<1x1x128xf32>
    tpu.vector_store %arg12[%c0_34, %c0_35, %c0_36], %293 {strides = array<i32>} : memref<1x1x128xf32, #tpu.memory_space<vmem>>, vector<1x1x128xf32>,
    return
  }
  func.func @transform_0(%arg0: i32) -> (i32, i32) {
    %c0_i32 = arith.constant 0 : i32
    %c0_i32_0 = arith.constant 0 : i32
    return %c0_i32, %arg0 : i32, i32
  }
  func.func @transform_1(%arg0: i32) -> (i32, i32) {
    %c0_i32 = arith.constant 0 : i32
    %c0_i32_0 = arith.constant 0 : i32
    %c0_i32_1 = arith.constant 0 : i32
    return %c0_i32, %c0_i32_0 : i32, i32
  }
  func.func @transform_2(%arg0: i32) -> (i32, i32) {
    %c0_i32 = arith.constant 0 : i32
    %c0_i32_0 = arith.constant 0 : i32
    %c0_i32_1 = arith.constant 0 : i32
    return %c0_i32, %c0_i32_0 : i32, i32
  }
  func.func @transform_3(%arg0: i32) -> (i32, i32) {
    %c0_i32 = arith.constant 0 : i32
    %c0_i32_0 = arith.constant 0 : i32
    %c0_i32_1 = arith.constant 0 : i32
    return %c0_i32, %c0_i32_0 : i32, i32
  }
  func.func @transform_4(%arg0: i32) -> (i32, i32) {
    %c0_i32 = arith.constant 0 : i32
    %c0_i32_0 = arith.constant 0 : i32
    %c0_i32_1 = arith.constant 0 : i32
    return %c0_i32, %c0_i32_0 : i32, i32
  }
  func.func @transform_5(%arg0: i32) -> (i32, i32) {
    %c0_i32 = arith.constant 0 : i32
    %c0_i32_0 = arith.constant 0 : i32
    %c0_i32_1 = arith.constant 0 : i32
    return %c0_i32, %c0_i32_0 : i32, i32
  }
  func.func @transform_6(%arg0: i32) -> (i32, i32) {
    %c0_i32 = arith.constant 0 : i32
    %c0_i32_0 = arith.constant 0 : i32
    %c0_i32_1 = arith.constant 0 : i32
    return %c0_i32, %c0_i32_0 : i32, i32
  }
  func.func @transform_7(%arg0: i32) -> (i32, i32) {
    %c0_i32 = arith.constant 0 : i32
    %c0_i32_0 = arith.constant 0 : i32
    %c0_i32_1 = arith.constant 0 : i32
    return %c0_i32, %c0_i32_0 : i32, i32
  }
  func.func @transform_8(%arg0: i32) -> (i32, i32) {
    %c0_i32 = arith.constant 0 : i32
    %c0_i32_0 = arith.constant 0 : i32
    %c0_i32_1 = arith.constant 0 : i32
    return %c0_i32, %c0_i32_0 : i32, i32
  }
  func.func @transform_9(%arg0: i32) -> (i32, i32) {
    %c0_i32 = arith.constant 0 : i32
    %c0_i32_0 = arith.constant 0 : i32
    %c0_i32_1 = arith.constant 0 : i32
    return %c0_i32, %c0_i32_0 : i32, i32
  }
  func.func @transform_10(%arg0: i32) -> (i32, i32) {
    %c0_i32 = arith.constant 0 : i32
    %c0_i32_0 = arith.constant 0 : i32
    %c0_i32_1 = arith.constant 0 : i32
    return %c0_i32, %c0_i32_0 : i32, i32
  }
  func.func @transform_11(%arg0: i32) -> (i32, i32, i32) {
    %c0_i32 = arith.constant 0 : i32
    %c0_i32_0 = arith.constant 0 : i32
    %c0_i32_1 = arith.constant 0 : i32
    return %arg0, %c0_i32, %c0_i32_0 : i32, i32, i32
  }
}

</mosaic_0001>

<llo_original>
// kernel: tpu_custom_call.1
$region0: #{tpu_custom_call.1}
  #allocation0 [shape = 'u32[]', space=smem, size = 0x4, offset = 0x4, fixed_abs, tag = 'smem constant byte address 0x4 - core index']
  #allocation1 [shape = 'u32[144,128]{1,0:T(1,128)}', space=vmem, size = 0x12000, scoped, tag = 'internal scratch']
  #allocation2 [shape = 'f32[1,1]{1,0:T(1,128)S(1)}', space=vmem, size = 0x200, scoped, tag = 'scoped memory for tpu_custom_call.1']
  %s0 = inlined_call_operand.vmem [shape: f32[14,128], index: 0, kind: input, shape index: {}]
  %s1 = inlined_call_operand.vmem [shape: f32[32,3], index: 1, kind: input, shape index: {}]
  %s2 = inlined_call_operand.vmem [shape: f32[32,1], index: 2, kind: input, shape index: {}]
  %s3 = inlined_call_operand.vmem [shape: bf16[64,96], index: 3, kind: input, shape index: {}]
  %s4 = inlined_call_operand.vmem [shape: f32[64,1], index: 4, kind: input, shape index: {}]
  %s5 = inlined_call_operand.vmem [shape: bf16[64,128], index: 5, kind: input, shape index: {}]
  %s6 = inlined_call_operand.vmem [shape: f32[64,1], index: 6, kind: input, shape index: {}]
  %s7 = inlined_call_operand.vmem [shape: bf16[32,64], index: 7, kind: input, shape index: {}]
  %s8 = inlined_call_operand.vmem [shape: f32[32,1], index: 8, kind: input, shape index: {}]
  %s9 = inlined_call_operand.vmem [shape: f32[32,1], index: 9, kind: input, shape index: {}]
  %s10 = inlined_call_operand.<no memory space> [shape: f32[1,1], index: 10, kind: input, shape index: {}]
  %s11 = inlined_call_operand.hbm [shape: f32[1,1,128], index: 11, kind: output, shape index: {}]
  %s12 = sld [smem:[#allocation0]]
  $region54: #{tpu_custom_call.1} parent=0
    _
  %s14 = ssub.s32 1, %s12
  %s15 = scalar_select 0, %s14, %s12
  %v16 = vstv %s10
  %17 = vst [vmem:[#allocation2] sm:$0x1] %v16
  $region1: #{tpu_custom_call.1} parent=0
    #allocation3 [shape = 'u8[512]{0}', space=vmem, size = 0x400, scoped, tag = 'output window, operand 0, single buffered']
    #allocation4 [shape = 's32[1]{0}', space=sflag, size = 0x4, scoped, tag = 'scoped memory for tpu_custom_call.1']
    %18 = vsyncpa [#allocation4], 0
    // Predicated region
    $region2: #{tpu_custom_call.1} parent=1 // pred_check
      _
    $region3: #{tpu_custom_call.1} parent=1 // pred_check_branch
      %20 = sbr.rel (0) target = $region5
    $region4: #{tpu_custom_call.1} parent=1 // pred_region
      _
    $region5: #{tpu_custom_call.1} parent=1 // pred_fallthru
      _
    // Predicated region
    $region6: #{tpu_custom_call.1} parent=1 // pred_check
      _
    $region7: #{tpu_custom_call.1} parent=1 // pred_check_branch
      %22 = sbr.rel (0) target = $region9
    $region8: #{tpu_custom_call.1} parent=1 // pred_region
      _
    $region9: #{tpu_custom_call.1} parent=1 // pred_fallthru
      _
    // Predicated region
    $region10: #{tpu_custom_call.1} parent=1 // pred_check
      _
    $region11: #{tpu_custom_call.1} parent=1 // pred_check_branch
      %24 = sbr.rel (0) target = $region13
    $region12: #{tpu_custom_call.1} parent=1 // pred_region
      _
    $region13: #{tpu_custom_call.1} parent=1 // pred_fallthru
      _
    // Predicated region
    $region14: #{tpu_custom_call.1} parent=1 // pred_check
      _
    $region15: #{tpu_custom_call.1} parent=1 // pred_check_branch
      %26 = sbr.rel (0) target = $region17
    $region16: #{tpu_custom_call.1} parent=1 // pred_region
      _
    $region17: #{tpu_custom_call.1} parent=1 // pred_fallthru
      _
    // Predicated region
    $region18: #{tpu_custom_call.1} parent=1 // pred_check
      _
    $region19: #{tpu_custom_call.1} parent=1 // pred_check_branch
      %28 = sbr.rel (0) target = $region21
    $region20: #{tpu_custom_call.1} parent=1 // pred_region
      _
    $region21: #{tpu_custom_call.1} parent=1 // pred_fallthru
      _
    // Predicated region
    $region22: #{tpu_custom_call.1} parent=1 // pred_check
      _
    $region23: #{tpu_custom_call.1} parent=1 // pred_check_branch
      %30 = sbr.rel (0) target = $region25
    $region24: #{tpu_custom_call.1} parent=1 // pred_region
      _
    $region25: #{tpu_custom_call.1} parent=1 // pred_fallthru
      _
    // Predicated region
    $region26: #{tpu_custom_call.1} parent=1 // pred_check
      _
    $region27: #{tpu_custom_call.1} parent=1 // pred_check_branch
      %32 = sbr.rel (0) target = $region29
    $region28: #{tpu_custom_call.1} parent=1 // pred_region
      _
    $region29: #{tpu_custom_call.1} parent=1 // pred_fallthru
      _
    // Predicated region
    $region30: #{tpu_custom_call.1} parent=1 // pred_check
      _
    $region31: #{tpu_custom_call.1} parent=1 // pred_check_branch
      %34 = sbr.rel (0) target = $region33
    $region32: #{tpu_custom_call.1} parent=1 // pred_region
      _
    $region33: #{tpu_custom_call.1} parent=1 // pred_fallthru
      _
    // Predicated region
    $region34: #{tpu_custom_call.1} parent=1 // pred_check
      _
    $region35: #{tpu_custom_call.1} parent=1 // pred_check_branch
      %36 = sbr.rel (0) target = $region37
    $region36: #{tpu_custom_call.1} parent=1 // pred_region
      _
    $region37: #{tpu_custom_call.1} parent=1 // pred_fallthru
      _
    // Predicated region
    $region38: #{tpu_custom_call.1} parent=1 // pred_check
      _
    $region39: #{tpu_custom_call.1} parent=1 // pred_check_branch
      %38 = sbr.rel (0) target = $region41
    $region40: #{tpu_custom_call.1} parent=1 // pred_region
      _
    $region41: #{tpu_custom_call.1} parent=1 // pred_fallthru
      _
    // Predicated region
    $region42: #{tpu_custom_call.1} parent=1 // pred_check
      _
    $region43: #{tpu_custom_call.1} parent=1 // pred_check_branch
      %40 = sbr.rel (0) target = $region45
    $region44: #{tpu_custom_call.1} parent=1 // pred_region
      _
    $region45: #{tpu_custom_call.1} parent=1 // pred_fallthru
      _
    %v42 = vld [vmem:[%s0] sm:$0xff]
    %v43 = vld [vmem:[%s0 + $0x8] sm:$0x3f]
    %v44 = vld [vmem:[%s1] sm:$0xff]
    %v45 = vld [vmem:[%s1 + $0x8] sm:$0xff]
    %v46 = vld [vmem:[%s1 + $0x10] sm:$0xff]
    %v47 = vld [vmem:[%s1 + $0x18] sm:$0xff]
    %v48 = vld [vmem:[%s2] sm:$0xff]
    %v49 = vld [vmem:[%s2 + $0x8] sm:$0xff]
    %v50 = vld [vmem:[%s2 + $0x10] sm:$0xff]
    %v51 = vld [vmem:[%s2 + $0x18] sm:$0xff]
    %53 = vset.pattern.permute.xlu0 0
    %54 = vperm.xlu0 %53, %v44
    %v55 = vpop.permute.xlu0 %54
    %58 = vset.pattern.permute.xlu0 0
    %59 = vperm.xlu0 %58, %v45
    %v60 = vpop.permute.xlu0 %59
    %63 = vset.pattern.permute.xlu0 0
    %64 = vperm.xlu0 %63, %v46
    %v65 = vpop.permute.xlu0 %64
    %68 = vset.pattern.permute.xlu0 0
    %69 = vperm.xlu0 %68, %v47
    %v70 = vpop.permute.xlu0 %69
    %v72 = vlaneseq
    %v73 = vshrl.u32 %v72, 7
    %v74 = vsub.s32 0, %v73
    %v75 = vrot.slane %v42, %v74
    %v76 = vmul.f32 %v55, %v75
    %v77 = vmul.f32 %v60, %v75
    %v78 = vmul.f32 %v65, %v75
    %v79 = vmul.f32 %v70, %v75
    %80 = vset.pattern.permute.xlu0 1
    %81 = vperm.xlu0 %80, %v44
    %v82 = vpop.permute.xlu0 %81
    %84 = vset.pattern.permute.xlu0 1
    %85 = vperm.xlu0 %84, %v45
    %v86 = vpop.permute.xlu0 %85
    %88 = vset.pattern.permute.xlu0 1
    %89 = vperm.xlu0 %88, %v46
    %v90 = vpop.permute.xlu0 %89
    %92 = vset.pattern.permute.xlu0 1
    %93 = vperm.xlu0 %92, %v47
    %v94 = vpop.permute.xlu0 %93
    %v96 = vlaneseq
    %v97 = vshrl.u32 %v96, 7
    %v98 = vsub.s32 1, %v97
    %v99 = vrot.slane %v42, %v98
    %v100 = vmul.f32 %v82, %v99
    %v101 = vmul.f32 %v86, %v99
    %v102 = vmul.f32 %v90, %v99
    %v103 = vmul.f32 %v94, %v99
    %v104 = vadd.f32 %v76, %v100
    %v105 = vadd.f32 %v77, %v101
    %v106 = vadd.f32 %v78, %v102
    %v107 = vadd.f32 %v79, %v103
    %108 = vset.pattern.permute.xlu0 2
    %109 = vperm.xlu0 %108, %v44
    %v110 = vpop.permute.xlu0 %109
    %112 = vset.pattern.permute.xlu0 2
    %113 = vperm.xlu0 %112, %v45
    %v114 = vpop.permute.xlu0 %113
    %116 = vset.pattern.permute.xlu0 2
    %117 = vperm.xlu0 %116, %v46
    %v118 = vpop.permute.xlu0 %117
    %120 = vset.pattern.permute.xlu0 2
    %121 = vperm.xlu0 %120, %v47
    %v122 = vpop.permute.xlu0 %121
    %v124 = vlaneseq
    %v125 = vshrl.u32 %v124, 7
    %v126 = vsub.s32 2, %v125
    %v127 = vrot.slane %v42, %v126
    %v128 = vmul.f32 %v110, %v127
    %v129 = vmul.f32 %v114, %v127
    %v130 = vmul.f32 %v118, %v127
    %v131 = vmul.f32 %v122, %v127
    %v132 = vadd.f32 %v104, %v128
    %v133 = vadd.f32 %v105, %v129
    %v134 = vadd.f32 %v106, %v130
    %v135 = vadd.f32 %v107, %v131
    %v136 = vmul.f32 %v55, %v99
    %v137 = vmul.f32 %v60, %v99
    %v138 = vmul.f32 %v65, %v99
    %v139 = vmul.f32 %v70, %v99
    %v140 = vmul.f32 %v82, %v127
    %v141 = vmul.f32 %v86, %v127
    %v142 = vmul.f32 %v90, %v127
    %v143 = vmul.f32 %v94, %v127
    %v144 = vadd.f32 %v136, %v140
    %v145 = vadd.f32 %v137, %v141
    %v146 = vadd.f32 %v138, %v142
    %v147 = vadd.f32 %v139, %v143
    %v148 = vlaneseq
    %v149 = vshrl.u32 %v148, 7
    %v150 = vsub.s32 3, %v149
    %v151 = vrot.slane %v42, %v150
    %v152 = vmul.f32 %v110, %v151
    %v153 = vmul.f32 %v114, %v151
    %v154 = vmul.f32 %v118, %v151
    %v155 = vmul.f32 %v122, %v151
    %v156 = vadd.f32 %v144, %v152
    %v157 = vadd.f32 %v145, %v153
    %v158 = vadd.f32 %v146, %v154
    %v159 = vadd.f32 %v147, %v155
    %v160 = vmax.f32 %v132, %v156
    %v161 = vmax.f32 %v133, %v157
    %v162 = vmax.f32 %v134, %v158
    %v163 = vmax.f32 %v135, %v159
    %165 = vset.pattern.permute.xlu0 0
    %166 = vperm.xlu0 %165, %v48
    %v167 = vpop.permute.xlu0 %166
    %170 = vset.pattern.permute.xlu0 0
    %171 = vperm.xlu0 %170, %v49
    %v172 = vpop.permute.xlu0 %171
    %175 = vset.pattern.permute.xlu0 0
    %176 = vperm.xlu0 %175, %v50
    %v177 = vpop.permute.xlu0 %176
    %180 = vset.pattern.permute.xlu0 0
    %181 = vperm.xlu0 %180, %v51
    %v182 = vpop.permute.xlu0 %181
    %v184 = vadd.f32 %v160, %v167
    %v185 = vadd.f32 %v161, %v172
    %v186 = vadd.f32 %v162, %v177
    %v187 = vadd.f32 %v163, %v182
    %v188 = vmax.f32 %v184, 0.0
    %v189 = vmax.f32 %v185, 0.0
    %v190 = vmax.f32 %v186, 0.0
    %v191 = vmax.f32 %v187, 0.0
    %v192 = vpack.c.bf16 %v189, %v188
    %v193 = vpack.c.bf16 %v191, %v190
    %v194 = vmul.f32 %v55, %v127
    %v195 = vmul.f32 %v60, %v127
    %v196 = vmul.f32 %v65, %v127
    %v197 = vmul.f32 %v70, %v127
    %v198 = vmul.f32 %v82, %v151
    %v199 = vmul.f32 %v86, %v151
    %v200 = vmul.f32 %v90, %v151
    %v201 = vmul.f32 %v94, %v151
    %v202 = vadd.f32 %v194, %v198
    %v203 = vadd.f32 %v195, %v199
    %v204 = vadd.f32 %v196, %v200
    %v205 = vadd.f32 %v197, %v201
    %v206 = vlaneseq
    %v207 = vshrl.u32 %v206, 7
    %v208 = vsub.s32 4, %v207
    %v209 = vrot.slane %v42, %v208
    %v210 = vmul.f32 %v110, %v209
    %v211 = vmul.f32 %v114, %v209
    %v212 = vmul.f32 %v118, %v209
    %v213 = vmul.f32 %v122, %v209
    %v214 = vadd.f32 %v202, %v210
    %v215 = vadd.f32 %v203, %v211
    %v216 = vadd.f32 %v204, %v212
    %v217 = vadd.f32 %v205, %v213
    %v218 = vmul.f32 %v55, %v151
    %v219 = vmul.f32 %v60, %v151
    %v220 = vmul.f32 %v65, %v151
    %v221 = vmul.f32 %v70, %v151
    %v222 = vmul.f32 %v82, %v209
    %v223 = vmul.f32 %v86, %v209
    %v224 = vmul.f32 %v90, %v209
    %v225 = vmul.f32 %v94, %v209
    %v226 = vadd.f32 %v218, %v222
    %v227 = vadd.f32 %v219, %v223
    %v228 = vadd.f32 %v220, %v224
    %v229 = vadd.f32 %v221, %v225
    %v230 = vlaneseq
    %v231 = vshrl.u32 %v230, 7
    %v232 = vsub.s32 5, %v231
    %v233 = vrot.slane %v42, %v232
    %v234 = vmul.f32 %v110, %v233
    %v235 = vmul.f32 %v114, %v233
    %v236 = vmul.f32 %v118, %v233
    %v237 = vmul.f32 %v122, %v233
    %v238 = vadd.f32 %v226, %v234
    %v239 = vadd.f32 %v227, %v235
    %v240 = vadd.f32 %v228, %v236
    %v241 = vadd.f32 %v229, %v237
    %v242 = vmax.f32 %v214, %v238
    %v243 = vmax.f32 %v215, %v239
    %v244 = vmax.f32 %v216, %v240
    %v245 = vmax.f32 %v217, %v241
    %v246 = vadd.f32 %v242, %v167
    %v247 = vadd.f32 %v243, %v172
    %v248 = vadd.f32 %v244, %v177
    %v249 = vadd.f32 %v245, %v182
    %v250 = vmax.f32 %v246, 0.0
    %v251 = vmax.f32 %v247, 0.0
    %v252 = vmax.f32 %v248, 0.0
    %v253 = vmax.f32 %v249, 0.0
    %v254 = vpack.c.bf16 %v251, %v250
    %v255 = vpack.c.bf16 %v253, %v252
    %v256 = vmul.f32 %v55, %v209
    %v257 = vmul.f32 %v60, %v209
    %v258 = vmul.f32 %v65, %v209
    %v259 = vmul.f32 %v70, %v209
    %v260 = vmul.f32 %v82, %v233
    %v261 = vmul.f32 %v86, %v233
    %v262 = vmul.f32 %v90, %v233
    %v263 = vmul.f32 %v94, %v233
    %v264 = vadd.f32 %v256, %v260
    %v265 = vadd.f32 %v257, %v261
    %v266 = vadd.f32 %v258, %v262
    %v267 = vadd.f32 %v259, %v263
    %v268 = vlaneseq
    %v269 = vshrl.u32 %v268, 7
    %v270 = vsub.s32 6, %v269
    %v271 = vrot.slane %v42, %v270
    %v272 = vmul.f32 %v110, %v271
    %v273 = vmul.f32 %v114, %v271
    %v274 = vmul.f32 %v118, %v271
    %v275 = vmul.f32 %v122, %v271
    %v276 = vadd.f32 %v264, %v272
    %v277 = vadd.f32 %v265, %v273
    %v278 = vadd.f32 %v266, %v274
    %v279 = vadd.f32 %v267, %v275
    %v280 = vmul.f32 %v55, %v233
    %v281 = vmul.f32 %v60, %v233
    %v282 = vmul.f32 %v65, %v233
    %v283 = vmul.f32 %v70, %v233
    %v284 = vmul.f32 %v82, %v271
    %v285 = vmul.f32 %v86, %v271
    %v286 = vmul.f32 %v90, %v271
    %v287 = vmul.f32 %v94, %v271
    %v288 = vadd.f32 %v280, %v284
    %v289 = vadd.f32 %v281, %v285
    %v290 = vadd.f32 %v282, %v286
    %v291 = vadd.f32 %v283, %v287
    %v292 = vlaneseq
    %v293 = vshrl.u32 %v292, 7
    %v294 = vsub.s32 7, %v293
    %v295 = vrot.slane %v42, %v294
    %v296 = vmul.f32 %v110, %v295
    %v297 = vmul.f32 %v114, %v295
    %v298 = vmul.f32 %v118, %v295
    %v299 = vmul.f32 %v122, %v295
    %v300 = vadd.f32 %v288, %v296
    %v301 = vadd.f32 %v289, %v297
    %v302 = vadd.f32 %v290, %v298
    %v303 = vadd.f32 %v291, %v299
    %v304 = vmax.f32 %v276, %v300
    %v305 = vmax.f32 %v277, %v301
    %v306 = vmax.f32 %v278, %v302
    %v307 = vmax.f32 %v279, %v303
    %v308 = vadd.f32 %v304, %v167
    %v309 = vadd.f32 %v305, %v172
    %v310 = vadd.f32 %v306, %v177
    %v311 = vadd.f32 %v307, %v182
    %v312 = vmax.f32 %v308, 0.0
    %v313 = vmax.f32 %v309, 0.0
    %v314 = vmax.f32 %v310, 0.0
    %v315 = vmax.f32 %v311, 0.0
    %v316 = vpack.c.bf16 %v313, %v312
    %v317 = vpack.c.bf16 %v315, %v314
    %v318 = vmul.f32 %v55, %v271
    %v319 = vmul.f32 %v60, %v271
    %v320 = vmul.f32 %v65, %v271
    %v321 = vmul.f32 %v70, %v271
    %v322 = vmul.f32 %v82, %v295
    %v323 = vmul.f32 %v86, %v295
    %v324 = vmul.f32 %v90, %v295
    %v325 = vmul.f32 %v94, %v295
    %v326 = vadd.f32 %v318, %v322
    %v327 = vadd.f32 %v319, %v323
    %v328 = vadd.f32 %v320, %v324
    %v329 = vadd.f32 %v321, %v325
    %v330 = vlaneseq
    %v331 = vshrl.u32 %v330, 7
    %v332 = vsub.s32 0, %v331
    %v333 = vrot.slane %v43, %v332
    %v334 = vmul.f32 %v110, %v333
    %v335 = vmul.f32 %v114, %v333
    %v336 = vmul.f32 %v118, %v333
    %v337 = vmul.f32 %v122, %v333
    %v338 = vadd.f32 %v326, %v334
    %v339 = vadd.f32 %v327, %v335
    %v340 = vadd.f32 %v328, %v336
    %v341 = vadd.f32 %v329, %v337
    %v342 = vmul.f32 %v55, %v295
    %v343 = vmul.f32 %v60, %v295
    %v344 = vmul.f32 %v65, %v295
    %v345 = vmul.f32 %v70, %v295
    %v346 = vmul.f32 %v82, %v333
    %v347 = vmul.f32 %v86, %v333
    %v348 = vmul.f32 %v90, %v333
    %v349 = vmul.f32 %v94, %v333
    %v350 = vadd.f32 %v342, %v346
    %v351 = vadd.f32 %v343, %v347
    %v352 = vadd.f32 %v344, %v348
    %v353 = vadd.f32 %v345, %v349
    %v354 = vlaneseq
    %v355 = vshrl.u32 %v354, 7
    %v356 = vsub.s32 1, %v355
    %v357 = vrot.slane %v43, %v356
    %v358 = vmul.f32 %v110, %v357
    %v359 = vmul.f32 %v114, %v357
    %v360 = vmul.f32 %v118, %v357
    %v361 = vmul.f32 %v122, %v357
    %v362 = vadd.f32 %v350, %v358
    %v363 = vadd.f32 %v351, %v359
    %v364 = vadd.f32 %v352, %v360
    %v365 = vadd.f32 %v353, %v361
    %v366 = vmax.f32 %v338, %v362
    %v367 = vmax.f32 %v339, %v363
    %v368 = vmax.f32 %v340, %v364
    %v369 = vmax.f32 %v341, %v365
    %v370 = vadd.f32 %v366, %v167
    %v371 = vadd.f32 %v367, %v172
    %v372 = vadd.f32 %v368, %v177
    %v373 = vadd.f32 %v369, %v182
    %v374 = vmax.f32 %v370, 0.0
    %v375 = vmax.f32 %v371, 0.0
    %v376 = vmax.f32 %v372, 0.0
    %v377 = vmax.f32 %v373, 0.0
    %v378 = vpack.c.bf16 %v375, %v374
    %v379 = vpack.c.bf16 %v377, %v376
    %v380 = vmul.f32 %v55, %v333
    %v381 = vmul.f32 %v60, %v333
    %v382 = vmul.f32 %v65, %v333
    %v383 = vmul.f32 %v70, %v333
    %v384 = vmul.f32 %v82, %v357
    %v385 = vmul.f32 %v86, %v357
    %v386 = vmul.f32 %v90, %v357
    %v387 = vmul.f32 %v94, %v357
    %v388 = vadd.f32 %v380, %v384
    %v389 = vadd.f32 %v381, %v385
    %v390 = vadd.f32 %v382, %v386
    %v391 = vadd.f32 %v383, %v387
    %v392 = vlaneseq
    %v393 = vshrl.u32 %v392, 7
    %v394 = vsub.s32 2, %v393
    %v395 = vrot.slane %v43, %v394
    %v396 = vmul.f32 %v110, %v395
    %v397 = vmul.f32 %v114, %v395
    %v398 = vmul.f32 %v118, %v395
    %v399 = vmul.f32 %v122, %v395
    %v400 = vadd.f32 %v388, %v396
    %v401 = vadd.f32 %v389, %v397
    %v402 = vadd.f32 %v390, %v398
    %v403 = vadd.f32 %v391, %v399
    %v404 = vmul.f32 %v55, %v357
    %v405 = vmul.f32 %v60, %v357
    %v406 = vmul.f32 %v65, %v357
    %v407 = vmul.f32 %v70, %v357
    %v408 = vmul.f32 %v82, %v395
    %v409 = vmul.f32 %v86, %v395
    %v410 = vmul.f32 %v90, %v395
    %v411 = vmul.f32 %v94, %v395
    %v412 = vadd.f32 %v404, %v408
    %v413 = vadd.f32 %v405, %v409
    %v414 = vadd.f32 %v406, %v410
    %v415 = vadd.f32 %v407, %v411
    %v416 = vlaneseq
    %v417 = vshrl.u32 %v416, 7
    %v418 = vsub.s32 3, %v417
    %v419 = vrot.slane %v43, %v418
    %v420 = vmul.f32 %v110, %v419
    %v421 = vmul.f32 %v114, %v419
    %v422 = vmul.f32 %v118, %v419
    %v423 = vmul.f32 %v122, %v419
    %v424 = vadd.f32 %v412, %v420
    %v425 = vadd.f32 %v413, %v421
    %v426 = vadd.f32 %v414, %v422
    %v427 = vadd.f32 %v415, %v423
    %v428 = vmax.f32 %v400, %v424
    %v429 = vmax.f32 %v401, %v425
    %v430 = vmax.f32 %v402, %v426
    %v431 = vmax.f32 %v403, %v427
    %v432 = vadd.f32 %v428, %v167
    %v433 = vadd.f32 %v429, %v172
    %v434 = vadd.f32 %v430, %v177
    %v435 = vadd.f32 %v431, %v182
    %v436 = vmax.f32 %v432, 0.0
    %v437 = vmax.f32 %v433, 0.0
    %v438 = vmax.f32 %v434, 0.0
    %v439 = vmax.f32 %v435, 0.0
    %v440 = vpack.c.bf16 %v437, %v436
    %v441 = vpack.c.bf16 %v439, %v438
    %v442 = vmul.f32 %v55, %v395
    %v443 = vmul.f32 %v60, %v395
    %v444 = vmul.f32 %v65, %v395
    %v445 = vmul.f32 %v70, %v395
    %v446 = vmul.f32 %v82, %v419
    %v447 = vmul.f32 %v86, %v419
    %v448 = vmul.f32 %v90, %v419
    %v449 = vmul.f32 %v94, %v419
    %v450 = vadd.f32 %v442, %v446
    %v451 = vadd.f32 %v443, %v447
    %v452 = vadd.f32 %v444, %v448
    %v453 = vadd.f32 %v445, %v449
    %v454 = vlaneseq
    %v455 = vshrl.u32 %v454, 7
    %v456 = vsub.s32 4, %v455
    %v457 = vrot.slane %v43, %v456
    %v458 = vmul.f32 %v110, %v457
    %v459 = vmul.f32 %v114, %v457
    %v460 = vmul.f32 %v118, %v457
    %v461 = vmul.f32 %v122, %v457
    %v462 = vadd.f32 %v450, %v458
    %v463 = vadd.f32 %v451, %v459
    %v464 = vadd.f32 %v452, %v460
    %v465 = vadd.f32 %v453, %v461
    %v466 = vmul.f32 %v55, %v419
    %v467 = vmul.f32 %v60, %v419
    %v468 = vmul.f32 %v65, %v419
    %v469 = vmul.f32 %v70, %v419
    %v470 = vmul.f32 %v82, %v457
    %v471 = vmul.f32 %v86, %v457
    %v472 = vmul.f32 %v90, %v457
    %v473 = vmul.f32 %v94, %v457
    %v474 = vadd.f32 %v466, %v470
    %v475 = vadd.f32 %v467, %v471
    %v476 = vadd.f32 %v468, %v472
    %v477 = vadd.f32 %v469, %v473
    %v478 = vlaneseq
    %v479 = vshrl.u32 %v478, 7
    %v480 = vsub.s32 5, %v479
    %v481 = vrot.slane %v43, %v480
    %v482 = vmul.f32 %v110, %v481
    %v483 = vmul.f32 %v114, %v481
    %v484 = vmul.f32 %v118, %v481
    %v485 = vmul.f32 %v122, %v481
    %v486 = vadd.f32 %v474, %v482
    %v487 = vadd.f32 %v475, %v483
    %v488 = vadd.f32 %v476, %v484
    %v489 = vadd.f32 %v477, %v485
    %v490 = vmax.f32 %v462, %v486
    %v491 = vmax.f32 %v463, %v487
    %v492 = vmax.f32 %v464, %v488
    %v493 = vmax.f32 %v465, %v489
    %v494 = vadd.f32 %v490, %v167
    %v495 = vadd.f32 %v491, %v172
    %v496 = vadd.f32 %v492, %v177
    %v497 = vadd.f32 %v493, %v182
    %v498 = vmax.f32 %v494, 0.0
    %v499 = vmax.f32 %v495, 0.0
    %v500 = vmax.f32 %v496, 0.0
    %v501 = vmax.f32 %v497, 0.0
    %v502 = vpack.c.bf16 %v499, %v498
    %v503 = vpack.c.bf16 %v501, %v500
    %v504 = vld [vmem:[%s3] sm:$0xf]
    %v505 = vld [vmem:[%s3 + $0x4] sm:$0xf]
    %v506 = vld [vmem:[%s3 + $0x8] sm:$0xf]
    %v507 = vld [vmem:[%s3 + $0xc] sm:$0xf]
    %v508 = vld [vmem:[%s3 + $0x10] sm:$0xf]
    %v509 = vld [vmem:[%s3 + $0x14] sm:$0xf]
    %v510 = vld [vmem:[%s3 + $0x18] sm:$0xf]
    %v511 = vld [vmem:[%s3 + $0x1c] sm:$0xf]
    %v512 = vld [vmem:[%s4] sm:$0xff]
    %v513 = vld [vmem:[%s4 + $0x8] sm:$0xff]
    %v514 = vld [vmem:[%s4 + $0x10] sm:$0xff]
    %v515 = vld [vmem:[%s4 + $0x18] sm:$0xff]
    %v516 = vld [vmem:[%s4 + $0x20] sm:$0xff]
    %v517 = vld [vmem:[%s4 + $0x28] sm:$0xff]
    %v518 = vld [vmem:[%s4 + $0x30] sm:$0xff]
    %v519 = vld [vmem:[%s4 + $0x38] sm:$0xff]
    %521 = vset.pattern.permute.xlu0 0
    %522 = vperm.xlu0 %521, %v512
    %v523 = vpop.permute.xlu0 %522
    %526 = vset.pattern.permute.xlu0 0
    %527 = vperm.xlu0 %526, %v513
    %v528 = vpop.permute.xlu0 %527
    %531 = vset.pattern.permute.xlu0 0
    %532 = vperm.xlu0 %531, %v514
    %v533 = vpop.permute.xlu0 %532
    %536 = vset.pattern.permute.xlu0 0
    %537 = vperm.xlu0 %536, %v515
    %v538 = vpop.permute.xlu0 %537
    %541 = vset.pattern.permute.xlu0 0
    %542 = vperm.xlu0 %541, %v516
    %v543 = vpop.permute.xlu0 %542
    %546 = vset.pattern.permute.xlu0 0
    %547 = vperm.xlu0 %546, %v517
    %v548 = vpop.permute.xlu0 %547
    %551 = vset.pattern.permute.xlu0 0
    %552 = vperm.xlu0 %551, %v518
    %v553 = vpop.permute.xlu0 %552
    %556 = vset.pattern.permute.xlu0 0
    %557 = vperm.xlu0 %556, %v519
    %v558 = vpop.permute.xlu0 %557
    %v568 = vunpack.c.l.b16 %v504
    %v569 = vunpack.c.l.b16 %v505
    %v570 = vunpack.c.l.b16 %v506
    %v571 = vunpack.c.l.b16 %v507
    %v572 = vunpack.c.l.b16 %v508
    %v573 = vunpack.c.l.b16 %v509
    %v574 = vunpack.c.l.b16 %v510
    %v575 = vunpack.c.l.b16 %v511
    %v576 = vpack.c.b16 %v569, %v568
    %v577 = vpack.c.b16 %v571, %v570
    %v578 = vpack.c.b16 %v573, %v572
    %v579 = vpack.c.b16 %v575, %v574
    %vm580 = vcmask 785408
    %v582 = vsel %vm580, %v576, 0
    %v585 = vsel %vm580, %v577, 0
    %v588 = vsel %vm580, %v578, 0
    %v591 = vsel %vm580, %v579, 0
    %593 = vmatprep.subr.bf16.mxu0 %v254
    %594 = vmatpush1.bf16.msra.mxu0 %v192
    %595 = vmatprep.subr.bf16.mxu0 %v255
    %596 = vmatpush1.bf16.msra.mxu0 %v193
    %597 = vmatprep.subr.bf16.mxu0 %v316
    %598 = vmatpush1.bf16.msra.mxu0 %v254
    %599 = vmatprep.subr.bf16.mxu0 %v317
    %600 = vmatpush1.bf16.msra.mxu0 %v255
    %601 = vmatprep.subr.bf16.mxu0 %v378
    %602 = vmatpush1.bf16.msra.mxu0 %v316
    %603 = vmatprep.subr.bf16.mxu0 %v379
    %604 = vmatpush1.bf16.msra.mxu0 %v317
    %605 = vmatprep.subr.bf16.mxu0 0
    %606 = vmatpush1.bf16.msra.mxu0 0
    %607 = vmatprep.subr.bf16.mxu0 0
    %608 = vmatpush1.bf16.msra.mxu0 0
    %609 = vmatprep.subr.bf16.mxu0 0
    %610 = vmatpush1.bf16.msra.mxu0 0
    %611 = vmatprep.subr.bf16.mxu0 0
    %612 = vmatpush1.bf16.msra.mxu0 0
    %613 = vmatprep.subr.bf16.mxu0 0
    %614 = vmatpush1.bf16.msra.mxu0 0
    %615 = vmatprep.subr.bf16.mxu0 0
    %616 = vmatpush1.bf16.msra.mxu0 0
    %617 = vmatprep.subr.bf16.mxu0 0
    %618 = vmatpush1.bf16.msra.mxu0 0
    %619 = vmatprep.subr.bf16.mxu0 0
    %620 = vmatpush1.bf16.msra.mxu0 0
    %621 = vmatprep.subr.bf16.mxu0 0
    %622 = vmatpush1.bf16.msra.mxu0 0
    %623 = vmatprep.subr.bf16.mxu0 0
    %624 = vmatpush1.bf16.msra.mxu0 0
    %625 = vmatprep.mubr.bf16.mxu0 0
    %626 = vmatmul.mubr.bf16.gmra.mrb[0].mxu0 %v582
    %v627 = vpop.f32.mrb[0].mxu0
    %v628 = vadd.f32 %v523, %v627
    %v629 = vpop.f32.mrb[0].mxu0
    %v630 = vadd.f32 %v523, %v629
    %v631 = vpop.f32.mrb[0].mxu0
    %v632 = vadd.f32 %v528, %v631
    %v633 = vpop.f32.mrb[0].mxu0
    %v634 = vadd.f32 %v528, %v633
    %635 = vmatprep.mubr.bf16.mxu0 0
    %636 = vmatmul.mubr.bf16.gmra.mrb[0].mxu0 %v585
    %v637 = vpop.f32.mrb[0].mxu0
    %v638 = vadd.f32 %v533, %v637
    %v639 = vpop.f32.mrb[0].mxu0
    %v640 = vadd.f32 %v533, %v639
    %v641 = vpop.f32.mrb[0].mxu0
    %v642 = vadd.f32 %v538, %v641
    %v643 = vpop.f32.mrb[0].mxu0
    %v644 = vadd.f32 %v538, %v643
    %645 = vmatprep.mubr.bf16.mxu0 0
    %646 = vmatmul.mubr.bf16.gmra.mrb[0].mxu0 %v588
    %v647 = vpop.f32.mrb[0].mxu0
    %v648 = vadd.f32 %v543, %v647
    %v649 = vpop.f32.mrb[0].mxu0
    %v650 = vadd.f32 %v543, %v649
    %v651 = vpop.f32.mrb[0].mxu0
    %v652 = vadd.f32 %v548, %v651
    %v653 = vpop.f32.mrb[0].mxu0
    %v654 = vadd.f32 %v548, %v653
    %655 = vmatprep.mubr.bf16.mxu0 0
    %656 = vmatmul.mubr.bf16.gmra.mrb[0].mxu0 %v591
    %v657 = vpop.f32.mrb[0].mxu0
    %v658 = vadd.f32 %v553, %v657
    %v659 = vpop.f32.mrb[0].mxu0
    %v660 = vadd.f32 %v553, %v659
    %v661 = vpop.f32.mrb[0].mxu0
    %v662 = vadd.f32 %v558, %v661
    %v663 = vpop.f32.mrb[0].mxu0
    %v664 = vadd.f32 %v558, %v663
    %665 = vdwg.mxu0
    %666 = vmatprep.subr.bf16.mxu0 %v378
    %667 = vmatpush1.bf16.msra.mxu0 %v316
    %668 = vmatprep.subr.bf16.mxu0 %v379
    %669 = vmatpush1.bf16.msra.mxu0 %v317
    %670 = vmatprep.subr.bf16.mxu0 %v440
    %671 = vmatpush1.bf16.msra.mxu0 %v378
    %672 = vmatprep.subr.bf16.mxu0 %v441
    %673 = vmatpush1.bf16.msra.mxu0 %v379
    %674 = vmatprep.subr.bf16.mxu0 %v502
    %675 = vmatpush1.bf16.msra.mxu0 %v440
    %676 = vmatprep.subr.bf16.mxu0 %v503
    %677 = vmatpush1.bf16.msra.mxu0 %v441
    %678 = vmatprep.subr.bf16.mxu0 0
    %679 = vmatpush1.bf16.msra.mxu0 0
    %680 = vmatprep.subr.bf16.mxu0 0
    %681 = vmatpush1.bf16.msra.mxu0 0
    %682 = vmatprep.subr.bf16.mxu0 0
    %683 = vmatpush1.bf16.msra.mxu0 0
    %684 = vmatprep.subr.bf16.mxu0 0
    %685 = vmatpush1.bf16.msra.mxu0 0
    %686 = vmatprep.subr.bf16.mxu0 0
    %687 = vmatpush1.bf16.msra.mxu0 0
    %688 = vmatprep.subr.bf16.mxu0 0
    %689 = vmatpush1.bf16.msra.mxu0 0
    %690 = vmatprep.subr.bf16.mxu0 0
    %691 = vmatpush1.bf16.msra.mxu0 0
    %692 = vmatprep.subr.bf16.mxu0 0
    %693 = vmatpush1.bf16.msra.mxu0 0
    %694 = vmatprep.subr.bf16.mxu0 0
    %695 = vmatpush1.bf16.msra.mxu0 0
    %696 = vmatprep.subr.bf16.mxu0 0
    %697 = vmatpush1.bf16.msra.mxu0 0
    %698 = vmatprep.mubr.bf16.mxu0 0
    %699 = vmatmul.mubr.bf16.gmra.mrb[0].mxu0 %v582
    %v700 = vpop.f32.mrb[0].mxu0
    %v701 = vadd.f32 %v523, %v700
    %v702 = vpop.f32.mrb[0].mxu0
    %v703 = vadd.f32 %v523, %v702
    %v704 = vpop.f32.mrb[0].mxu0
    %v705 = vadd.f32 %v528, %v704
    %v706 = vpop.f32.mrb[0].mxu0
    %v707 = vadd.f32 %v528, %v706
    %708 = vmatprep.mubr.bf16.mxu0 0
    %709 = vmatmul.mubr.bf16.gmra.mrb[0].mxu0 %v585
    %v710 = vpop.f32.mrb[0].mxu0
    %v711 = vadd.f32 %v533, %v710
    %v712 = vpop.f32.mrb[0].mxu0
    %v713 = vadd.f32 %v533, %v712
    %v714 = vpop.f32.mrb[0].mxu0
    %v715 = vadd.f32 %v538, %v714
    %v716 = vpop.f32.mrb[0].mxu0
    %v717 = vadd.f32 %v538, %v716
    %718 = vmatprep.mubr.bf16.mxu0 0
    %719 = vmatmul.mubr.bf16.gmra.mrb[0].mxu0 %v588
    %v720 = vpop.f32.mrb[0].mxu0
    %v721 = vadd.f32 %v543, %v720
    %v722 = vpop.f32.mrb[0].mxu0
    %v723 = vadd.f32 %v543, %v722
    %v724 = vpop.f32.mrb[0].mxu0
    %v725 = vadd.f32 %v548, %v724
    %v726 = vpop.f32.mrb[0].mxu0
    %v727 = vadd.f32 %v548, %v726
    %728 = vmatprep.mubr.bf16.mxu0 0
    %729 = vmatmul.mubr.bf16.gmra.mrb[0].mxu0 %v591
    %v730 = vpop.f32.mrb[0].mxu0
    %v731 = vadd.f32 %v553, %v730
    %v732 = vpop.f32.mrb[0].mxu0
    %v733 = vadd.f32 %v553, %v732
    %v734 = vpop.f32.mrb[0].mxu0
    %v735 = vadd.f32 %v558, %v734
    %v736 = vpop.f32.mrb[0].mxu0
    %v737 = vadd.f32 %v558, %v736
    %738 = vdwg.mxu0
    %v739 = vmax.f32 %v628, 0.0
    %v740 = vmax.f32 %v630, 0.0
    %v741 = vmax.f32 %v701, 0.0
    %v742 = vmax.f32 %v703, 0.0
    %v743 = vmax.f32 %v632, 0.0
    %v744 = vmax.f32 %v634, 0.0
    %v745 = vmax.f32 %v705, 0.0
    %v746 = vmax.f32 %v707, 0.0
    %v747 = vmax.f32 %v638, 0.0
    %v748 = vmax.f32 %v640, 0.0
    %v749 = vmax.f32 %v711, 0.0
    %v750 = vmax.f32 %v713, 0.0
    %v751 = vmax.f32 %v642, 0.0
    %v752 = vmax.f32 %v644, 0.0
    %v753 = vmax.f32 %v715, 0.0
    %v754 = vmax.f32 %v717, 0.0
    %v755 = vmax.f32 %v648, 0.0
    %v756 = vmax.f32 %v650, 0.0
    %v757 = vmax.f32 %v721, 0.0
    %v758 = vmax.f32 %v723, 0.0
    %v759 = vmax.f32 %v652, 0.0
    %v760 = vmax.f32 %v654, 0.0
    %v761 = vmax.f32 %v725, 0.0
    %v762 = vmax.f32 %v727, 0.0
    %v763 = vmax.f32 %v658, 0.0
    %v764 = vmax.f32 %v660, 0.0
    %v765 = vmax.f32 %v731, 0.0
    %v766 = vmax.f32 %v733, 0.0
    %v767 = vmax.f32 %v662, 0.0
    %v768 = vmax.f32 %v664, 0.0
    %v769 = vmax.f32 %v735, 0.0
    %v770 = vmax.f32 %v737, 0.0
    %v771 = vmax.f32 %v739, %v740
    %v772 = vmax.f32 %v743, %v744
    %v773 = vmax.f32 %v747, %v748
    %v774 = vmax.f32 %v751, %v752
    %v775 = vmax.f32 %v755, %v756
    %v776 = vmax.f32 %v759, %v760
    %v777 = vmax.f32 %v763, %v764
    %v778 = vmax.f32 %v767, %v768
    %v779 = vmax.f32 %v741, %v742
    %v780 = vmax.f32 %v745, %v746
    %v781 = vmax.f32 %v749, %v750
    %v782 = vmax.f32 %v753, %v754
    %v783 = vmax.f32 %v757, %v758
    %v784 = vmax.f32 %v761, %v762
    %v785 = vmax.f32 %v765, %v766
    %v786 = vmax.f32 %v769, %v770
    %v787 = vpack.c.bf16 %v772, %v771
    %v788 = vpack.c.bf16 %v774, %v773
    %v789 = vpack.c.bf16 %v776, %v775
    %v790 = vpack.c.bf16 %v778, %v777
    %v791 = vpack.c.bf16 %v780, %v779
    %v792 = vpack.c.bf16 %v782, %v781
    %v793 = vpack.c.bf16 %v784, %v783
    %v794 = vpack.c.bf16 %v786, %v785
    %v795 = vld [vmem:[%s5] sm:$0xf]
    %v796 = vld [vmem:[%s5 + $0x4] sm:$0xf]
    %v797 = vld [vmem:[%s5 + $0x8] sm:$0xf]
    %v798 = vld [vmem:[%s5 + $0xc] sm:$0xf]
    %v799 = vld [vmem:[%s5 + $0x10] sm:$0xf]
    %v800 = vld [vmem:[%s5 + $0x14] sm:$0xf]
    %v801 = vld [vmem:[%s5 + $0x18] sm:$0xf]
    %v802 = vld [vmem:[%s5 + $0x1c] sm:$0xf]
    %v803 = vld [vmem:[%s6] sm:$0xff]
    %v804 = vld [vmem:[%s6 + $0x8] sm:$0xff]
    %v805 = vld [vmem:[%s6 + $0x10] sm:$0xff]
    %v806 = vld [vmem:[%s6 + $0x18] sm:$0xff]
    %v807 = vld [vmem:[%s6 + $0x20] sm:$0xff]
    %v808 = vld [vmem:[%s6 + $0x28] sm:$0xff]
    %v809 = vld [vmem:[%s6 + $0x30] sm:$0xff]
    %v810 = vld [vmem:[%s6 + $0x38] sm:$0xff]
    %812 = vset.pattern.permute.xlu0 0
    %813 = vperm.xlu0 %812, %v803
    %v814 = vpop.permute.xlu0 %813
    %817 = vset.pattern.permute.xlu0 0
    %818 = vperm.xlu0 %817, %v804
    %v819 = vpop.permute.xlu0 %818
    %822 = vset.pattern.permute.xlu0 0
    %823 = vperm.xlu0 %822, %v805
    %v824 = vpop.permute.xlu0 %823
    %827 = vset.pattern.permute.xlu0 0
    %828 = vperm.xlu0 %827, %v806
    %v829 = vpop.permute.xlu0 %828
    %832 = vset.pattern.permute.xlu0 0
    %833 = vperm.xlu0 %832, %v807
    %v834 = vpop.permute.xlu0 %833
    %837 = vset.pattern.permute.xlu0 0
    %838 = vperm.xlu0 %837, %v808
    %v839 = vpop.permute.xlu0 %838
    %842 = vset.pattern.permute.xlu0 0
    %843 = vperm.xlu0 %842, %v809
    %v844 = vpop.permute.xlu0 %843
    %847 = vset.pattern.permute.xlu0 0
    %848 = vperm.xlu0 %847, %v810
    %v849 = vpop.permute.xlu0 %848
    %v859 = vunpack.c.l.b16 %v795
    %v860 = vunpack.c.l.b16 %v796
    %v861 = vunpack.c.l.b16 %v797
    %v862 = vunpack.c.l.b16 %v798
    %v863 = vunpack.c.l.b16 %v799
    %v864 = vunpack.c.l.b16 %v800
    %v865 = vunpack.c.l.b16 %v801
    %v866 = vunpack.c.l.b16 %v802
    %v867 = vpack.c.b16 %v860, %v859
    %v868 = vpack.c.b16 %v862, %v861
    %v869 = vpack.c.b16 %v864, %v863
    %v870 = vpack.c.b16 %v866, %v865
    %875 = vmatprep.subr.bf16.mxu0 0
    %876 = vmatpush1.bf16.msra.mxu0 %v787
    %877 = vmatprep.subr.bf16.mxu0 0
    %878 = vmatpush1.bf16.msra.mxu0 %v788
    %879 = vmatprep.subr.bf16.mxu0 0
    %880 = vmatpush1.bf16.msra.mxu0 %v789
    %881 = vmatprep.subr.bf16.mxu0 0
    %882 = vmatpush1.bf16.msra.mxu0 %v790
    %883 = vmatprep.subr.bf16.mxu0 0
    %884 = vmatpush1.bf16.msra.mxu0 %v791
    %885 = vmatprep.subr.bf16.mxu0 0
    %886 = vmatpush1.bf16.msra.mxu0 %v792
    %887 = vmatprep.subr.bf16.mxu0 0
    %888 = vmatpush1.bf16.msra.mxu0 %v793
    %889 = vmatprep.subr.bf16.mxu0 0
    %890 = vmatpush1.bf16.msra.mxu0 %v794
    %891 = vmatprep.subr.bf16.mxu0 0
    %892 = vmatpush1.bf16.msra.mxu0 0
    %893 = vmatprep.subr.bf16.mxu0 0
    %894 = vmatpush1.bf16.msra.mxu0 0
    %895 = vmatprep.subr.bf16.mxu0 0
    %896 = vmatpush1.bf16.msra.mxu0 0
    %897 = vmatprep.subr.bf16.mxu0 0
    %898 = vmatpush1.bf16.msra.mxu0 0
    %899 = vmatprep.subr.bf16.mxu0 0
    %900 = vmatpush1.bf16.msra.mxu0 0
    %901 = vmatprep.subr.bf16.mxu0 0
    %902 = vmatpush1.bf16.msra.mxu0 0
    %903 = vmatprep.subr.bf16.mxu0 0
    %904 = vmatpush1.bf16.msra.mxu0 0
    %905 = vmatprep.subr.bf16.mxu0 0
    %906 = vmatpush1.bf16.msra.mxu0 0
    %907 = vmatprep.mubr.bf16.mxu0 0
    %908 = vmatmul.mubr.bf16.gmra.mrb[0].mxu0 %v867
    %v909 = vpop.f32.mrb[0].mxu0
    %v910 = vadd.f32 %v814, %v909
    %v911 = vpop.f32.mrb[0].mxu0
    %v912 = vpop.f32.mrb[0].mxu0
    %v913 = vadd.f32 %v819, %v912
    %v914 = vpop.f32.mrb[0].mxu0
    %915 = vmatprep.mubr.bf16.mxu0 0
    %916 = vmatmul.mubr.bf16.gmra.mrb[0].mxu0 %v868
    %v917 = vpop.f32.mrb[0].mxu0
    %v918 = vadd.f32 %v824, %v917
    %v919 = vpop.f32.mrb[0].mxu0
    %v920 = vpop.f32.mrb[0].mxu0
    %v921 = vadd.f32 %v829, %v920
    %v922 = vpop.f32.mrb[0].mxu0
    %923 = vmatprep.mubr.bf16.mxu0 0
    %924 = vmatmul.mubr.bf16.gmra.mrb[0].mxu0 %v869
    %v925 = vpop.f32.mrb[0].mxu0
    %v926 = vadd.f32 %v834, %v925
    %v927 = vpop.f32.mrb[0].mxu0
    %v928 = vpop.f32.mrb[0].mxu0
    %v929 = vadd.f32 %v839, %v928
    %v930 = vpop.f32.mrb[0].mxu0
    %931 = vmatprep.mubr.bf16.mxu0 0
    %932 = vmatmul.mubr.bf16.gmra.mrb[0].mxu0 %v870
    %v933 = vpop.f32.mrb[0].mxu0
    %v934 = vadd.f32 %v844, %v933
    %v935 = vpop.f32.mrb[0].mxu0
    %v936 = vpop.f32.mrb[0].mxu0
    %v937 = vadd.f32 %v849, %v936
    %v938 = vpop.f32.mrb[0].mxu0
    %939 = vdwg.mxu0
    %v940 = vmax.f32 %v910, 0.0
    %v941 = vmax.f32 %v913, 0.0
    %v942 = vmax.f32 %v918, 0.0
    %v943 = vmax.f32 %v921, 0.0
    %v944 = vmax.f32 %v926, 0.0
    %v945 = vmax.f32 %v929, 0.0
    %v946 = vmax.f32 %v934, 0.0
    %v947 = vmax.f32 %v937, 0.0
    %v948 = vld [vmem:[%s7] sm:$0xf]
    %v949 = vld [vmem:[%s7 + $0x4] sm:$0xf]
    %v950 = vld [vmem:[%s7 + $0x8] sm:$0xf]
    %v951 = vld [vmem:[%s7 + $0xc] sm:$0xf]
    %v952 = vpack.c.bf16 %v941, %v940
    %v953 = vpack.c.bf16 %v943, %v942
    %v954 = vpack.c.bf16 %v945, %v944
    %v955 = vpack.c.bf16 %v947, %v946
    %v956 = vld [vmem:[%s8] sm:$0xff]
    %v957 = vld [vmem:[%s8 + $0x8] sm:$0xff]
    %v958 = vld [vmem:[%s8 + $0x10] sm:$0xff]
    %v959 = vld [vmem:[%s8 + $0x18] sm:$0xff]
    %961 = vset.pattern.permute.xlu0 0
    %962 = vperm.xlu0 %961, %v956
    %v963 = vpop.permute.xlu0 %962
    %966 = vset.pattern.permute.xlu0 0
    %967 = vperm.xlu0 %966, %v957
    %v968 = vpop.permute.xlu0 %967
    %971 = vset.pattern.permute.xlu0 0
    %972 = vperm.xlu0 %971, %v958
    %v973 = vpop.permute.xlu0 %972
    %976 = vset.pattern.permute.xlu0 0
    %977 = vperm.xlu0 %976, %v959
    %v978 = vpop.permute.xlu0 %977
    %v984 = vunpack.c.l.b16 %v948
    %v985 = vunpack.c.l.b16 %v949
    %v986 = vunpack.c.l.b16 %v950
    %v987 = vunpack.c.l.b16 %v951
    %v988 = vpack.c.b16 %v985, %v984
    %v989 = vpack.c.b16 %v987, %v986
    %vm990 = vcmask 523264
    %v992 = vsel %vm990, %v988, 0
    %v995 = vsel %vm990, %v989, 0
    %997 = vmatprep.subr.bf16.mxu0 0
    %998 = vmatpush1.bf16.msra.mxu0 %v952
    %999 = vmatprep.subr.bf16.mxu0 0
    %1000 = vmatpush1.bf16.msra.mxu0 %v953
    %1001 = vmatprep.subr.bf16.mxu0 0
    %1002 = vmatpush1.bf16.msra.mxu0 %v954
    %1003 = vmatprep.subr.bf16.mxu0 0
    %1004 = vmatpush1.bf16.msra.mxu0 %v955
    %1005 = vmatprep.subr.bf16.mxu0 0
    %1006 = vmatpush1.bf16.msra.mxu0 0
    %1007 = vmatprep.subr.bf16.mxu0 0
    %1008 = vmatpush1.bf16.msra.mxu0 0
    %1009 = vmatprep.subr.bf16.mxu0 0
    %1010 = vmatpush1.bf16.msra.mxu0 0
    %1011 = vmatprep.subr.bf16.mxu0 0
    %1012 = vmatpush1.bf16.msra.mxu0 0
    %1013 = vmatprep.subr.bf16.mxu0 0
    %1014 = vmatpush1.bf16.msra.mxu0 0
    %1015 = vmatprep.subr.bf16.mxu0 0
    %1016 = vmatpush1.bf16.msra.mxu0 0
    %1017 = vmatprep.subr.bf16.mxu0 0
    %1018 = vmatpush1.bf16.msra.mxu0 0
    %1019 = vmatprep.subr.bf16.mxu0 0
    %1020 = vmatpush1.bf16.msra.mxu0 0
    %1021 = vmatprep.subr.bf16.mxu0 0
    %1022 = vmatpush1.bf16.msra.mxu0 0
    %1023 = vmatprep.subr.bf16.mxu0 0
    %1024 = vmatpush1.bf16.msra.mxu0 0
    %1025 = vmatprep.subr.bf16.mxu0 0
    %1026 = vmatpush1.bf16.msra.mxu0 0
    %1027 = vmatprep.subr.bf16.mxu0 0
    %1028 = vmatpush1.bf16.msra.mxu0 0
    %1029 = vmatprep.mubr.bf16.mxu0 0
    %1030 = vmatmul.mubr.bf16.gmra.mrb[0].mxu0 %v992
    %v1031 = vpop.f32.mrb[0].mxu0
    %v1032 = vadd.f32 %v963, %v1031
    %v1033 = vpop.f32.mrb[0].mxu0
    %v1034 = vpop.f32.mrb[0].mxu0
    %v1035 = vadd.f32 %v968, %v1034
    %v1036 = vpop.f32.mrb[0].mxu0
    %1037 = vmatprep.mubr.bf16.mxu0 0
    %1038 = vmatmul.mubr.bf16.gmra.mrb[0].mxu0 %v995
    %v1039 = vpop.f32.mrb[0].mxu0
    %v1040 = vadd.f32 %v973, %v1039
    %v1041 = vpop.f32.mrb[0].mxu0
    %v1042 = vpop.f32.mrb[0].mxu0
    %v1043 = vadd.f32 %v978, %v1042
    %v1044 = vpop.f32.mrb[0].mxu0
    %1045 = vdwg.mxu0
    %v1046 = vmax.f32 %v1032, 0.0
    %v1047 = vmax.f32 %v1035, 0.0
    %v1048 = vmax.f32 %v1040, 0.0
    %v1049 = vmax.f32 %v1043, 0.0
    %v1050 = vld [vmem:[%s9] sm:$0xff]
    %v1051 = vld [vmem:[%s9 + $0x8] sm:$0xff]
    %v1052 = vld [vmem:[%s9 + $0x10] sm:$0xff]
    %v1053 = vld [vmem:[%s9 + $0x18] sm:$0xff]
    %1055 = vset.pattern.permute.xlu0 0
    %1056 = vperm.xlu0 %1055, %v1050
    %v1057 = vpop.permute.xlu0 %1056
    %1060 = vset.pattern.permute.xlu0 0
    %1061 = vperm.xlu0 %1060, %v1051
    %v1062 = vpop.permute.xlu0 %1061
    %1065 = vset.pattern.permute.xlu0 0
    %1066 = vperm.xlu0 %1065, %v1052
    %v1067 = vpop.permute.xlu0 %1066
    %1070 = vset.pattern.permute.xlu0 0
    %1071 = vperm.xlu0 %1070, %v1053
    %v1072 = vpop.permute.xlu0 %1071
    %v1074 = vmul.f32 %v1046, %v1057
    %v1075 = vmul.f32 %v1047, %v1062
    %v1076 = vmul.f32 %v1048, %v1067
    %v1077 = vmul.f32 %v1049, %v1072
    %v1078 = vadd.f32 %v1074, %v1075
    %v1079 = vadd.f32 %v1078, %v1076
    %v1080 = vadd.f32 %v1079, %v1077
    %v1081 = vrot.slane %v1080, 4
    %v1082 = vadd.f32 %v1080, %v1081
    %v1083 = vrot.slane %v1082, 2
    %v1084 = vadd.f32 %v1082, %v1083
    %v1085 = vrot.slane %v1084, 1
    %v1086 = vadd.f32 %v1084, %v1085
    %v1087 = vld [vmem:[#allocation2] sm:$0x1]
    %1089 = vset.pattern.permute.xlu0 0
    %1090 = vperm.xlu0 %1089, %v1087
    %v1091 = vpop.permute.xlu0 %1090
    %v1093 = vlaneseq
    %v1094 = vshrl.u32 %v1093, 7
    %v1095 = vsub.s32 0, %v1094
    %v1096 = vrot.slane %v1091, %v1095
    %v1097 = vadd.f32 %v1086, %v1096
    %v1098 = vxor.u32 %v1097, 2147483648
    %v1099 = vmul.f32 %v1098, 1.442695
    %v1100 = vpow.pop %v1099
    %v1101 = vadd.f32 %v1100, 1.0
    %v1102 = vrcp.pop %v1101
    %v1103 = vmul.f32 1.0, %v1102
    %1104 = vst [vmem:[#allocation3] sm:$0x1] %v1103
    // Predicated region
    $region46: #{tpu_custom_call.1} parent=1 // pred_check
      _
    $region47: #{tpu_custom_call.1} parent=1 // pred_check_branch
      %1106 = sbr.rel (0) target = $region49
    $region48: #{tpu_custom_call.1} parent=1 // pred_region
      %s1108 = ssub.s32 16, 16
      %1109 = vsyncadd [#allocation4], %s1108
      %s1111 = sshll.u32 [#allocation3], 4
      %s1112 = int_to_ptr.vmem [resolvable:$true] %s1111
      %1114 = dma.vmem_to_hbm [thread:$0]  %s1112, 16, %s11, [#allocation4]
    $region49: #{tpu_custom_call.1} parent=1 // pred_fallthru
      _
    // Predicated region
    $region50: #{tpu_custom_call.1} parent=1 // pred_check
      _
    $region51: #{tpu_custom_call.1} parent=1 // pred_check_branch
      %1116 = sbr.rel (0) target = $region53
    $region52: #{tpu_custom_call.1} parent=1 // pred_region
      %1117 = dma.done [#allocation4], 16
    $region53: #{tpu_custom_call.1} parent=1 // pred_fallthru
      _
    %1118 = vsyncpa [#allocation4], 1

</llo_original>
